<compile_context>
chip_gen: v7x
topology: tpu7x:2x2x1
jax: 0.10.0
libtpu: 0.0.40
codegen_flags: <defaults>
</compile_context>

<pallas_src>
import jax
import jax.numpy as jnp
from jax.experimental import pallas as pl
from jax.experimental.pallas import tpu as pltpu

LANES = 128          # lane width of a vreg
D_IN = 30
MAX_TILE_ROWS = 64   # 64 rows-of-128 = 8192 batch rows/step (~4 MiB VMEM block)
MIN_GRID_STEPS = 4   # keep v7x's two cores fed + some pipeline depth


def lr_kernel(x_ref, w_ref, b_ref, o_ref):
    # x_ref: (tile_rows, 128, 30) VMEM  -- batch rows on sublanes+lanes
    # w_ref: (1, 1, 30)           VMEM  -- fused weight row (W1 @ W2), resident
    # b_ref: (1, 1)               SMEM  -- fused bias scalar (b1 @ W2 + b2)
    # o_ref: (tile_rows, 128)     VMEM  -- lane-dense output slab
    z = jnp.sum(x_ref[...] * w_ref[...], axis=-1) + b_ref[0, 0]
    o_ref[...] = jax.nn.sigmoid(z)


def _round_up(n, m):
    return ((n + m - 1) // m) * m


def _pick_tile_rows(rows):
    # Tile must be a multiple of 8 (sublane constraint on the (tile, 128)
    # output block).  Cap at MAX_TILE_ROWS (keeps double-buffered VMEM use at
    # ~8 MiB, inside v5e's 16 MiB scoped default) and prefer >= MIN_GRID_STEPS
    # grid steps so the "parallel" axis can feed both v7x TensorCores.
    target = max(1, -(-rows // MIN_GRID_STEPS))
    target = _round_up(target, 8)
    return max(8, min(MAX_TILE_ROWS, target))


def lr_forward(x, w1, b1, w2, b2):
    """x: [B, 30] f32. Returns [B] f32 = sigmoid(fc2(fc1(x))).squeeze(-1)."""
    B, d_in = x.shape

    # Fuse the two linear layers (no nonlinearity between them).
    w_eff = (w1 @ w2).reshape(1, 1, d_in).astype(jnp.float32)   # [1, 1, 30]
    b_eff = (b1 @ w2 + b2).reshape(1, 1).astype(jnp.float32)    # [1, 1]

    # Pad only to a multiple of 128 (needed for the free row-major reshape
    # that folds 128 batch rows onto the lane axis).  No padding at all when
    # B is already a multiple of 128.
    b_pad = _round_up(B, LANES)
    if b_pad != B:
        x = jnp.pad(x, ((0, b_pad - B), (0, 0)))
    rows = b_pad // LANES
    x3 = x.reshape(rows, LANES, d_in)                           # (rows, 128, 30)

    tile_rows = _pick_tile_rows(rows)
    grid = (pl.cdiv(rows, tile_rows),)   # ragged tail handled by Pallas

    cost = pl.CostEstimate(
        flops=2 * b_pad * d_in + b_pad,
        transcendentals=b_pad,
        bytes_accessed=b_pad * d_in * 4 + b_pad * 4,
    )

    out = pl.pallas_call(
        lr_kernel,
        out_shape=jax.ShapeDtypeStruct((rows, LANES), jnp.float32),
        grid=grid,
        in_specs=[
            # x: tiled over the batch, double-buffered by the pipeline.
            pl.BlockSpec((tile_rows, LANES, d_in), lambda i: (i, 0, 0)),
            # fused weight row: same block every step -> stays VMEM-resident.
            pl.BlockSpec((1, 1, d_in), lambda i: (0, 0, 0)),
            # fused bias scalar lives in SMEM for the whole kernel.
            pl.BlockSpec(memory_space=pltpu.MemorySpace.SMEM),
        ],
        out_specs=pl.BlockSpec((tile_rows, LANES), lambda i: (i, 0)),
        compiler_params=pltpu.CompilerParams(
            dimension_semantics=("parallel",)),
        cost_estimate=cost,
    )(x3, w_eff, b_eff)

    return out.reshape(b_pad)[:B]


def _ref_forward(x, w1, b1, w2, b2):
    # Unfused reference, same math as the PyTorch module.
    h = x @ w1 + b1
    z = h @ w2 + b2
    return jax.nn.sigmoid(z).squeeze(-1)


if __name__ == "__main__":
    key = jax.random.PRNGKey(0)
    k_x, k_w1, k_b1, k_w2, k_b2 = jax.random.split(key, 5)

    B, D_HID, D_OUT = 1200, 10, 1   # B not a multiple of 128 -> exercises the
                                    # 128-pad and the ragged last grid block.

    x = jax.random.normal(k_x, (B, D_IN), dtype=jnp.float32)
    # Deterministic parameter init (uniform, PyTorch-default Linear scale).
    bound1 = 1.0 / (D_IN ** 0.5)
    bound2 = 1.0 / (D_HID ** 0.5)
    w1 = jax.random.uniform(k_w1, (D_IN, D_HID), jnp.float32, -bound1, bound1)
    b1 = jax.random.uniform(k_b1, (D_HID,), jnp.float32, -bound1, bound1)
    w2 = jax.random.uniform(k_w2, (D_HID, D_OUT), jnp.float32, -bound2, bound2)
    b2 = jax.random.uniform(k_b2, (D_OUT,), jnp.float32, -bound2, bound2)

    out = jax.block_until_ready(lr_forward(x, w1, b1, w2, b2))
    ref = _ref_forward(x, w1, b1, w2, b2)

    assert out.shape == (B,), f"expected shape ({B},), got {out.shape}"
    assert jnp.allclose(out, ref, atol=1e-5, rtol=1e-5), "mismatch vs reference"
    print("KERNEL_OK")
</pallas_src>

<mosaic_0001>
module attributes {stable_mosaic.version = 11 : i64} {
  func.func @lr_kernel(%arg0: i32, %arg1: memref<8x128x30xf32, #tpu.memory_space<vmem>>, %arg2: memref<1x1x30xf32, #tpu.memory_space<vmem>>, %arg3: memref<1x1xf32, #tpu.memory_space<smem>>, %arg4: memref<8x128xf32, #tpu.memory_space<vmem>>) attributes {dimension_semantics = [#tpu.dimension_semantics<parallel>], iteration_bounds = array<i64: 2>, scalar_prefetch = 0 : i64, scratch_operands = 0 : i64, tpu.core_type = #tpu.core_type<tc>, window_params = [{transform_indices = @transform_0, window_bounds = array<i64: 8, 128, 30>}, {pipeline_mode = #tpu.pipeline_mode<synchronous>, transform_indices = @transform_1, window_bounds = array<i64: 1, 1, 30>}, {transform_indices = @transform_2, window_bounds = array<i64: 1, 1>}, {transform_indices = @transform_3, window_bounds = array<i64: 8, 128>}]} {
    %c0 = arith.constant 0 : index
    %c0_0 = arith.constant 0 : index
    %c0_1 = arith.constant 0 : index
    %0 = vector.load %arg1[%c0, %c0_0, %c0_1] : memref<8x128x30xf32, #tpu.memory_space<vmem>>, vector<8x128x30xf32>
    %c0_2 = arith.constant 0 : index
    %c0_3 = arith.constant 0 : index
    %c0_4 = arith.constant 0 : index
    %1 = vector.load %arg2[%c0_2, %c0_3, %c0_4] : memref<1x1x30xf32, #tpu.memory_space<vmem>>, vector<1x1x30xf32>
    %2 = vector.broadcast %1 : vector<1x1x30xf32> to vector<8x128x30xf32>
    %3 = arith.mulf %0, %2 : vector<8x128x30xf32>
    %cst = arith.constant dense<0.000000e+00> : vector<8x128xf32>
    %4 = vector.multi_reduction <add>, %3, %cst [2] : vector<8x128x30xf32> to vector<8x128xf32>
    %c0_5 = arith.constant 0 : index
    %c0_6 = arith.constant 0 : index
    %5 = memref.load %arg3[%c0_5, %c0_6] : memref<1x1xf32, #tpu.memory_space<smem>>
    %6 = vector.broadcast %5 : f32 to vector<8x128xf32>
    %7 = arith.addf %4, %6 : vector<8x128xf32>
    %8 = arith.negf %7 : vector<8x128xf32>
    %9 = math.exp %8 : vector<8x128xf32>
    %cst_7 = arith.constant 1.000000e+00 : f32
    %10 = vector.broadcast %cst_7 : f32 to vector<8x128xf32>
    %11 = arith.addf %10, %9 : vector<8x128xf32>
    %12 = arith.divf %10, %11 : vector<8x128xf32>
    %c0_8 = arith.constant 0 : index
    %c0_9 = arith.constant 0 : index
    %13 = vector.load %arg4[%c0_8, %c0_9] : memref<8x128xf32, #tpu.memory_space<vmem>>, vector<8x128xf32>
    tpu.vector_store %arg4[%c0_8, %c0_9], %12 {strides = array<i32>} : memref<8x128xf32, #tpu.memory_space<vmem>>, vector<8x128xf32>,
    return
  }
  func.func @transform_0(%arg0: i32) -> (i32, i32, i32) {
    %c0_i32 = arith.constant 0 : i32
    %c0_i32_0 = arith.constant 0 : i32
    %c0_i32_1 = arith.constant 0 : i32
    return %arg0, %c0_i32, %c0_i32_0 : i32, i32, i32
  }
  func.func @transform_1(%arg0: i32) -> (i32, i32, i32) {
    %c0_i32 = arith.constant 0 : i32
    %c0_i32_0 = arith.constant 0 : i32
    %c0_i32_1 = arith.constant 0 : i32
    %c0_i32_2 = arith.constant 0 : i32
    return %c0_i32, %c0_i32_0, %c0_i32_1 : i32, i32, i32
  }
  func.func @transform_2(%arg0: i32) -> (i32, i32) {
    %c0_i32 = arith.constant 0 : i32
    %c0_i32_0 = arith.constant 0 : i32
    %c0_i32_1 = arith.constant 0 : i32
    return %c0_i32, %c0_i32_0 : i32, i32
  }
  func.func @transform_3(%arg0: i32) -> (i32, i32) {
    %c0_i32 = arith.constant 0 : i32
    %c0_i32_0 = arith.constant 0 : i32
    return %arg0, %c0_i32 : i32, i32
  }
}

</mosaic_0001>

<llo_original>
// kernel: tpu_custom_call.1
$region0: #{tpu_custom_call.1}
  #allocation0 [shape = 'u32[]', space=smem, size = 0x4, offset = 0x4, fixed_abs, tag = 'smem constant byte address 0x4 - core index']
  #allocation1 [shape = 'u32[144,128]{1,0:T(1,128)}', space=vmem, size = 0x12000, scoped, tag = 'internal scratch']
  #allocation2 [shape = 'f32[1,1]{1,0:T(1,128)S(6)}', space=smem, size = 0x200, scoped, tag = 'scoped memory for tpu_custom_call.1']
  %s0 = inlined_call_operand.vmem [shape: f32[10,128,30], index: 0, kind: input, shape index: {}]
  %s1 = inlined_call_operand.vmem [shape: f32[1,1,30], index: 1, kind: input, shape index: {}]
  %s2 = inlined_call_operand.<no memory space> [shape: f32[1,1], index: 2, kind: input, shape index: {}]
  %s3 = inlined_call_operand.hbm [shape: f32[10,128], index: 3, kind: output, shape index: {}]
  %s4 = sld [smem:[#allocation0]]
  $region45: #{tpu_custom_call.1} parent=0
    _
  %s6 = ssub.s32 1, %s4
  %s7 = scalar_select 0, %s6, %s4
  %8 = sst [smem:[#allocation2]] %s2
  $region1: #{tpu_custom_call.1} parent=0
    #allocation3 [shape = 'u8[8192]{0}', space=vmem, size = 0x2000, scoped, tag = 'output window, operand 0']
    #allocation4 [shape = 's32[2]{0}', space=sflag, size = 0x8, scoped, tag = 'scoped memory for tpu_custom_call.1']
    %9 = vsyncpa [#allocation4], 0
    %s10 = scalar_lea.sflag [#allocation4], 1
    %11 = vsyncpa %s10, 0
    loop: start=0, step=1, limit=4
    $region2: #{tpu_custom_call.1} parent=1 // loop_pre_header
      _
    $region3: #{tpu_custom_call.1} parent=1 // loop_header
      %s13 = sphi 0, %s17
      %p14 = scmp.ge.s32.totalorder %s13, 4
      %s23 = sphi 0, %s25
      %s26 = sphi 0, %s23
      %s27 = sphi 0, %s26
      %s43 = sphi 0, %s27
      %s47 = sphi 0, %s47
      %s49 = sphi 0, %s47
      %s50 = sphi 0, %s49
      %s64 = sphi 0, %s50
      %s68 = sphi 0, %s68
      %s70 = sphi 0, %s68
      %s71 = sphi 0, %s70
      %s85 = sphi 0, %s71
      %s91 = sphi 0, %s93
      %s94 = sphi 0, %s91
      %s95 = sphi 0, %s94
      %s111 = sphi 0, %s95
    $region4: #{tpu_custom_call.1} parent=1 // loop_header_branch
      %16 = sbr.rel (%p14) target = $region8
    $region5: #{tpu_custom_call.1} parent=1 // loop_body
      %s18 = ssub.s32 %s13, 1
      %s19 = ssub.s32 %s13, 2
      %s20 = sadd.s32 %s13, 1
      %s21 = ssub.s32 %s13, %s20
      %p22 = scmp.eq.s32.totalorder %s21, 0
      %s24 = sadd.s32 %s23, 1
      %s25 = scalar_select %p22, %s23, %s24
      %p28 = pneg %p22
      %p29 = scmp.eq.s32.totalorder %s13, 1
      %p30 = por %p28, %p29
      %p31 = scmp.ne.s32.totalorder %s23, %s26
      %p32 = scmp.eq.s32.totalorder %s13, 0
      %p33 = por %p31, %p32
      %p34 = scmp.ne.s32.totalorder %s23, %s26
      %p35 = scmp.eq.s32.totalorder %s18, 1
      %p36 = por %p34, %p35
      %p37 = scmp.ne.s32.totalorder %s26, %s27
      %p38 = scmp.eq.s32.totalorder %s18, 0
      %p39 = por %p37, %p38
      %p40 = scmp.ne.s32.totalorder %s26, %s27
      %p41 = scmp.eq.s32.totalorder %s19, 1
      %p42 = por %p40, %p41
      %p44 = scmp.ne.s32.totalorder %s27, %s43
      %p45 = scmp.eq.s32.totalorder %s19, 0
      %p46 = por %p44, %p45
      %s48 = sadd.s32 %s47, 1
      %p51 = scmp.eq.s32.totalorder %s13, 1
      %p52 = scmp.ne.s32.totalorder %s47, %s49
      %p53 = scmp.eq.s32.totalorder %s13, 0
      %p54 = por %p52, %p53
      %p55 = scmp.ne.s32.totalorder %s47, %s49
      %p56 = scmp.eq.s32.totalorder %s18, 1
      %p57 = por %p55, %p56
      %p58 = scmp.ne.s32.totalorder %s49, %s50
      %p59 = scmp.eq.s32.totalorder %s18, 0
      %p60 = por %p58, %p59
      %p61 = scmp.ne.s32.totalorder %s49, %s50
      %p62 = scmp.eq.s32.totalorder %s19, 1
      %p63 = por %p61, %p62
      %p65 = scmp.ne.s32.totalorder %s50, %s64
      %p66 = scmp.eq.s32.totalorder %s19, 0
      %p67 = por %p65, %p66
      %s69 = sadd.s32 %s68, 1
      %p72 = scmp.eq.s32.totalorder %s13, 1
      %p73 = scmp.ne.s32.totalorder %s68, %s70
      %p74 = scmp.eq.s32.totalorder %s13, 0
      %p75 = por %p73, %p74
      %p76 = scmp.ne.s32.totalorder %s68, %s70
      %p77 = scmp.eq.s32.totalorder %s18, 1
      %p78 = por %p76, %p77
      %p79 = scmp.ne.s32.totalorder %s70, %s71
      %p80 = scmp.eq.s32.totalorder %s18, 0
      %p81 = por %p79, %p80
      %p82 = scmp.ne.s32.totalorder %s70, %s71
      %p83 = scmp.eq.s32.totalorder %s19, 1
      %p84 = por %p82, %p83
      %p86 = scmp.ne.s32.totalorder %s71, %s85
      %p87 = scmp.eq.s32.totalorder %s19, 0
      %p88 = por %p86, %p87
      %s89 = ssub.s32 %s13, %s20
      %p90 = scmp.eq.s32.totalorder %s89, 0
      %s92 = sadd.s32 %s91, 1
      %s93 = scalar_select %p90, %s91, %s92
      %p96 = pneg %p90
      %p97 = scmp.eq.s32.totalorder %s13, 1
      %p98 = por %p96, %p97
      %p99 = scmp.ne.s32.totalorder %s91, %s94
      %p100 = scmp.eq.s32.totalorder %s13, 0
      %p101 = por %p99, %p100
      %p102 = scmp.ne.s32.totalorder %s91, %s94
      %p103 = scmp.eq.s32.totalorder %s18, 1
      %p104 = por %p102, %p103
      %p105 = scmp.ne.s32.totalorder %s94, %s95
      %p106 = scmp.eq.s32.totalorder %s18, 0
      %p107 = por %p105, %p106
      %p108 = scmp.ne.s32.totalorder %s94, %s95
      %p109 = scmp.eq.s32.totalorder %s19, 1
      %p110 = por %p108, %p109
      %p112 = scmp.ne.s32.totalorder %s95, %s111
      %p113 = scmp.eq.s32.totalorder %s19, 0
      %p114 = por %p112, %p113
      %p115 = scmp.le.s32.totalorder 1, %s13
      %p116 = scmp.lt.s32.totalorder %s13, 3
      %p117 = pnand %p115, %p116
      %p118 = pneg %p117
      // Predicated region
      $region9: #{tpu_custom_call.1} parent=5 // pred_check
        _
      $region10: #{tpu_custom_call.1} parent=5 // pred_check_branch
        %120 = sbr.rel (%p117) target = $region12
      $region11: #{tpu_custom_call.1} parent=5 // pred_region
        %s121 = ssub.s32 %s13, 1
        // Predicated region
        $region13: #{tpu_custom_call.1} parent=11 // pred_check
          %p122 = pneg %p60
        $region14: #{tpu_custom_call.1} parent=11 // pred_check_branch
          %124 = sbr.rel (%p122) target = $region16
        $region15: #{tpu_custom_call.1} parent=11 // pred_region
          _
        $region16: #{tpu_custom_call.1} parent=11 // pred_fallthru
          _
        // Predicated region
        $region17: #{tpu_custom_call.1} parent=11 // pred_check
          %p125 = pneg %p81
        $region18: #{tpu_custom_call.1} parent=11 // pred_check_branch
          %127 = sbr.rel (%p125) target = $region20
        $region19: #{tpu_custom_call.1} parent=11 // pred_region
          _
        $region20: #{tpu_custom_call.1} parent=11 // pred_fallthru
          _
      $region12: #{tpu_custom_call.1} parent=5 // pred_fallthru
        _
      %p128 = scmp.lt.s32.totalorder %s13, 2
      // Predicated region
      $region21: #{tpu_custom_call.1} parent=5 // pred_check
        %p129 = pneg %p128
      $region22: #{tpu_custom_call.1} parent=5 // pred_check_branch
        %131 = sbr.rel (%p129) target = $region24
      $region23: #{tpu_custom_call.1} parent=5 // pred_region
        // Predicated region
        $region25: #{tpu_custom_call.1} parent=23 // pred_check
          %p132 = pneg %p33
        $region26: #{tpu_custom_call.1} parent=23 // pred_check_branch
          %134 = sbr.rel (%p132) target = $region28
        $region27: #{tpu_custom_call.1} parent=23 // pred_region
          %s135 = smul.u32 8, %s13
          %s136 = ssub.s32 10, %s135
          %p137 = scmp.lt.s32.totalorder %s136, 8
          %s138 = scalar_select %p137, %s136, 8
          %s139 = smul.u32 128, %s138
          %s140 = smul.u32 %s139, 16
          %p141 = scmp.lt.s32.totalorder %s135, 9
          %s142 = scalar_select %p141, %s135, 9
          %s143 = smul.addr %s142, 16
          %s144 = smul.addr %s143, 8
          %s145 = scalar_lea.vmem %s0, %s144
          %s146 = smul.u32 8, %s13
          %s147 = ssub.s32 10, %s146
          %p148 = scmp.lt.s32.totalorder %s147, 8
          %s149 = scalar_select %p148, %s147, 8
          %s150 = smul.u32 128, %s149
          %s151 = smul.u32 %s150, 16
        $region28: #{tpu_custom_call.1} parent=23 // pred_fallthru
          _
      $region24: #{tpu_custom_call.1} parent=5 // pred_fallthru
        _
      %p152 = scmp.le.s32.totalorder 1, %s13
      %p153 = scmp.lt.s32.totalorder %s13, 3
      %p154 = pnand %p152, %p153
      %p155 = pneg %p154
      // Predicated region
      $region29: #{tpu_custom_call.1} parent=5 // pred_check
        _
      $region30: #{tpu_custom_call.1} parent=5 // pred_check_branch
        %157 = sbr.rel (%p154) target = $region32
      $region31: #{tpu_custom_call.1} parent=5 // pred_region
        %s158 = ssub.s32 %s13, 1
        %s159 = smul.u32 8, %s18
        %s160 = ssub.s32 10, %s159
        %p161 = scmp.lt.s32.totalorder %s160, 8
        %s162 = scalar_select %p161, %s160, 8
        %s163 = smul.u32 128, %s162
        %s164 = smul.u32 %s163, 16
        %p165 = scmp.lt.s32.totalorder %s159, 9
        %s166 = scalar_select %p165, %s159, 9
        %s167 = smul.addr %s166, 16
        %s168 = smul.addr %s167, 8
        %s169 = scalar_lea.vmem %s0, %s168
        %p170 = pneg %p39
        %p171 = pneg %p36
        %p172 = pneg %p60
        %p173 = pneg %p57
        %p174 = pneg %p81
        %p175 = pneg %p78
        %p176 = pneg %p107
        %p177 = pneg %p104
        %s178 = sand.u32 %s94, 1
        %s179 = scalar_lea.sflag [#allocation4], %s178
        %s180 = sand.u32 %s94, 1
        %s181 = smul.addr %s180, 8
        %s182 = scalar_lea.vmem [#allocation3], %s181
        %s183 = smul.u32 8, %s18
        %s184 = ssub.s32 10, %s183
        %p185 = scmp.lt.s32.totalorder %s184, 8
        %s186 = scalar_select %p185, %s184, 8
        %s187 = smul.u32 128, %s186
        %s188 = smul.u32 %s187, 16
        %p189 = scmp.lt.s32.totalorder %s183, 9
        %s190 = scalar_select %p189, %s183, 9
        %s191 = smul.addr %s190, 16
        %s192 = smul.addr %s191, 8
        %s193 = scalar_lea.vmem %s0, %s192
        %s194 = smul.u32 8, %s18
        %s195 = ssub.s32 10, %s194
        %p196 = scmp.lt.s32.totalorder %s195, 8
        %s197 = scalar_select %p196, %s195, 8
        %s198 = smul.u32 128, %s197
        %s199 = smul.u32 %s198, 16
        %v200 = vld [vmem:[%s193] sm:$0xff]
        %v201 = vld [vmem:[%s193 + $0x8] sm:$0xff]
        %v202 = vld [vmem:[%s193 + $0x10] sm:$0xff]
        %v203 = vld [vmem:[%s193 + $0x18] sm:$0xff]
        %v204 = vld [vmem:[%s193 + $0x20] sm:$0xff]
        %v205 = vld [vmem:[%s193 + $0x28] sm:$0xff]
        %v206 = vld [vmem:[%s193 + $0x30] sm:$0xff]
        %v207 = vld [vmem:[%s193 + $0x38] sm:$0xff]
        %v208 = vld [vmem:[%s193 + $0x40] sm:$0xff]
        %v209 = vld [vmem:[%s193 + $0x48] sm:$0xff]
        %v210 = vld [vmem:[%s193 + $0x50] sm:$0xff]
        %v211 = vld [vmem:[%s193 + $0x58] sm:$0xff]
        %v212 = vld [vmem:[%s193 + $0x60] sm:$0xff]
        %v213 = vld [vmem:[%s193 + $0x68] sm:$0xff]
        %v214 = vld [vmem:[%s193 + $0x70] sm:$0xff]
        %v215 = vld [vmem:[%s193 + $0x78] sm:$0xff]
        %v216 = vld [vmem:[%s193 + $0x80] sm:$0xff]
        %v217 = vld [vmem:[%s193 + $0x88] sm:$0xff]
        %v218 = vld [vmem:[%s193 + $0x90] sm:$0xff]
        %v219 = vld [vmem:[%s193 + $0x98] sm:$0xff]
        %v220 = vld [vmem:[%s193 + $0xa0] sm:$0xff]
        %v221 = vld [vmem:[%s193 + $0xa8] sm:$0xff]
        %v222 = vld [vmem:[%s193 + $0xb0] sm:$0xff]
        %v223 = vld [vmem:[%s193 + $0xb8] sm:$0xff]
        %v224 = vld [vmem:[%s193 + $0xc0] sm:$0xff]
        %v225 = vld [vmem:[%s193 + $0xc8] sm:$0xff]
        %v226 = vld [vmem:[%s193 + $0xd0] sm:$0xff]
        %v227 = vld [vmem:[%s193 + $0xd8] sm:$0xff]
        %v228 = vld [vmem:[%s193 + $0xe0] sm:$0xff]
        %v229 = vld [vmem:[%s193 + $0xe8] sm:$0xff]
        %v230 = vld [vmem:[%s193 + $0xf0] sm:$0xff]
        %v231 = vld [vmem:[%s193 + $0xf8] sm:$0xff]
        %v232 = vld [vmem:[%s193 + $0x100] sm:$0xff]
        %v233 = vld [vmem:[%s193 + $0x108] sm:$0xff]
        %v234 = vld [vmem:[%s193 + $0x110] sm:$0xff]
        %v235 = vld [vmem:[%s193 + $0x118] sm:$0xff]
        %v236 = vld [vmem:[%s193 + $0x120] sm:$0xff]
        %v237 = vld [vmem:[%s193 + $0x128] sm:$0xff]
        %v238 = vld [vmem:[%s193 + $0x130] sm:$0xff]
        %v239 = vld [vmem:[%s193 + $0x138] sm:$0xff]
        %v240 = vld [vmem:[%s193 + $0x140] sm:$0xff]
        %v241 = vld [vmem:[%s193 + $0x148] sm:$0xff]
        %v242 = vld [vmem:[%s193 + $0x150] sm:$0xff]
        %v243 = vld [vmem:[%s193 + $0x158] sm:$0xff]
        %v244 = vld [vmem:[%s193 + $0x160] sm:$0xff]
        %v245 = vld [vmem:[%s193 + $0x168] sm:$0xff]
        %v246 = vld [vmem:[%s193 + $0x170] sm:$0xff]
        %v247 = vld [vmem:[%s193 + $0x178] sm:$0xff]
        %v248 = vld [vmem:[%s193 + $0x180] sm:$0xff]
        %v249 = vld [vmem:[%s193 + $0x188] sm:$0xff]
        %v250 = vld [vmem:[%s193 + $0x190] sm:$0xff]
        %v251 = vld [vmem:[%s193 + $0x198] sm:$0xff]
        %v252 = vld [vmem:[%s193 + $0x1a0] sm:$0xff]
        %v253 = vld [vmem:[%s193 + $0x1a8] sm:$0xff]
        %v254 = vld [vmem:[%s193 + $0x1b0] sm:$0xff]
        %v255 = vld [vmem:[%s193 + $0x1b8] sm:$0xff]
        %v256 = vld [vmem:[%s193 + $0x1c0] sm:$0xff]
        %v257 = vld [vmem:[%s193 + $0x1c8] sm:$0xff]
        %v258 = vld [vmem:[%s193 + $0x1d0] sm:$0xff]
        %v259 = vld [vmem:[%s193 + $0x1d8] sm:$0xff]
        %v260 = vld [vmem:[%s193 + $0x1e0] sm:$0xff]
        %v261 = vld [vmem:[%s193 + $0x1e8] sm:$0xff]
        %v262 = vld [vmem:[%s193 + $0x1f0] sm:$0xff]
        %v263 = vld [vmem:[%s193 + $0x1f8] sm:$0xff]
        %v264 = vld [vmem:[%s193 + $0x200] sm:$0xff]
        %v265 = vld [vmem:[%s193 + $0x208] sm:$0xff]
        %v266 = vld [vmem:[%s193 + $0x210] sm:$0xff]
        %v267 = vld [vmem:[%s193 + $0x218] sm:$0xff]
        %v268 = vld [vmem:[%s193 + $0x220] sm:$0xff]
        %v269 = vld [vmem:[%s193 + $0x228] sm:$0xff]
        %v270 = vld [vmem:[%s193 + $0x230] sm:$0xff]
        %v271 = vld [vmem:[%s193 + $0x238] sm:$0xff]
        %v272 = vld [vmem:[%s193 + $0x240] sm:$0xff]
        %v273 = vld [vmem:[%s193 + $0x248] sm:$0xff]
        %v274 = vld [vmem:[%s193 + $0x250] sm:$0xff]
        %v275 = vld [vmem:[%s193 + $0x258] sm:$0xff]
        %v276 = vld [vmem:[%s193 + $0x260] sm:$0xff]
        %v277 = vld [vmem:[%s193 + $0x268] sm:$0xff]
        %v278 = vld [vmem:[%s193 + $0x270] sm:$0xff]
        %v279 = vld [vmem:[%s193 + $0x278] sm:$0xff]
        %v280 = vld [vmem:[%s193 + $0x280] sm:$0xff]
        %v281 = vld [vmem:[%s193 + $0x288] sm:$0xff]
        %v282 = vld [vmem:[%s193 + $0x290] sm:$0xff]
        %v283 = vld [vmem:[%s193 + $0x298] sm:$0xff]
        %v284 = vld [vmem:[%s193 + $0x2a0] sm:$0xff]
        %v285 = vld [vmem:[%s193 + $0x2a8] sm:$0xff]
        %v286 = vld [vmem:[%s193 + $0x2b0] sm:$0xff]
        %v287 = vld [vmem:[%s193 + $0x2b8] sm:$0xff]
        %v288 = vld [vmem:[%s193 + $0x2c0] sm:$0xff]
        %v289 = vld [vmem:[%s193 + $0x2c8] sm:$0xff]
        %v290 = vld [vmem:[%s193 + $0x2d0] sm:$0xff]
        %v291 = vld [vmem:[%s193 + $0x2d8] sm:$0xff]
        %v292 = vld [vmem:[%s193 + $0x2e0] sm:$0xff]
        %v293 = vld [vmem:[%s193 + $0x2e8] sm:$0xff]
        %v294 = vld [vmem:[%s193 + $0x2f0] sm:$0xff]
        %v295 = vld [vmem:[%s193 + $0x2f8] sm:$0xff]
        %v296 = vld [vmem:[%s193 + $0x300] sm:$0xff]
        %v297 = vld [vmem:[%s193 + $0x308] sm:$0xff]
        %v298 = vld [vmem:[%s193 + $0x310] sm:$0xff]
        %v299 = vld [vmem:[%s193 + $0x318] sm:$0xff]
        %v300 = vld [vmem:[%s193 + $0x320] sm:$0xff]
        %v301 = vld [vmem:[%s193 + $0x328] sm:$0xff]
        %v302 = vld [vmem:[%s193 + $0x330] sm:$0xff]
        %v303 = vld [vmem:[%s193 + $0x338] sm:$0xff]
        %v304 = vld [vmem:[%s193 + $0x340] sm:$0xff]
        %v305 = vld [vmem:[%s193 + $0x348] sm:$0xff]
        %v306 = vld [vmem:[%s193 + $0x350] sm:$0xff]
        %v307 = vld [vmem:[%s193 + $0x358] sm:$0xff]
        %v308 = vld [vmem:[%s193 + $0x360] sm:$0xff]
        %v309 = vld [vmem:[%s193 + $0x368] sm:$0xff]
        %v310 = vld [vmem:[%s193 + $0x370] sm:$0xff]
        %v311 = vld [vmem:[%s193 + $0x378] sm:$0xff]
        %v312 = vld [vmem:[%s193 + $0x380] sm:$0xff]
        %v313 = vld [vmem:[%s193 + $0x388] sm:$0xff]
        %v314 = vld [vmem:[%s193 + $0x390] sm:$0xff]
        %v315 = vld [vmem:[%s193 + $0x398] sm:$0xff]
        %v316 = vld [vmem:[%s193 + $0x3a0] sm:$0xff]
        %v317 = vld [vmem:[%s193 + $0x3a8] sm:$0xff]
        %v318 = vld [vmem:[%s193 + $0x3b0] sm:$0xff]
        %v319 = vld [vmem:[%s193 + $0x3b8] sm:$0xff]
        %v320 = vld [vmem:[%s193 + $0x3c0] sm:$0xff]
        %v321 = vld [vmem:[%s193 + $0x3c8] sm:$0xff]
        %v322 = vld [vmem:[%s193 + $0x3d0] sm:$0xff]
        %v323 = vld [vmem:[%s193 + $0x3d8] sm:$0xff]
        %v324 = vld [vmem:[%s193 + $0x3e0] sm:$0xff]
        %v325 = vld [vmem:[%s193 + $0x3e8] sm:$0xff]
        %v326 = vld [vmem:[%s193 + $0x3f0] sm:$0xff]
        %v327 = vld [vmem:[%s193 + $0x3f8] sm:$0xff]
        %v328 = vld [vmem:[%s1] sm:$0x1]
        %v330 = vlaneseq
        %v331 = vshrl.u32 %v330, 7
        %v332 = vsub.s32 0, %v331
        %v333 = vrot.slane %v328, %v332
        %v335 = vmul.f32 %v200, %v333
        %v336 = vmul.f32 %v201, %v333
        %v337 = vmul.f32 %v202, %v333
        %v338 = vmul.f32 %v203, %v333
        %v339 = vmul.f32 %v204, %v333
        %v340 = vmul.f32 %v205, %v333
        %v341 = vmul.f32 %v206, %v333
        %v342 = vmul.f32 %v207, %v333
        %v343 = vmul.f32 %v208, %v333
        %v344 = vmul.f32 %v209, %v333
        %v345 = vmul.f32 %v210, %v333
        %v346 = vmul.f32 %v211, %v333
        %v347 = vmul.f32 %v212, %v333
        %v348 = vmul.f32 %v213, %v333
        %v349 = vmul.f32 %v214, %v333
        %v350 = vmul.f32 %v215, %v333
        %v351 = vmul.f32 %v216, %v333
        %v352 = vmul.f32 %v217, %v333
        %v353 = vmul.f32 %v218, %v333
        %v354 = vmul.f32 %v219, %v333
        %v355 = vmul.f32 %v220, %v333
        %v356 = vmul.f32 %v221, %v333
        %v357 = vmul.f32 %v222, %v333
        %v358 = vmul.f32 %v223, %v333
        %v359 = vmul.f32 %v224, %v333
        %v360 = vmul.f32 %v225, %v333
        %v361 = vmul.f32 %v226, %v333
        %v362 = vmul.f32 %v227, %v333
        %v363 = vmul.f32 %v228, %v333
        %v364 = vmul.f32 %v229, %v333
        %v365 = vmul.f32 %v230, %v333
        %v366 = vmul.f32 %v231, %v333
        %v367 = vmul.f32 %v232, %v333
        %v368 = vmul.f32 %v233, %v333
        %v369 = vmul.f32 %v234, %v333
        %v370 = vmul.f32 %v235, %v333
        %v371 = vmul.f32 %v236, %v333
        %v372 = vmul.f32 %v237, %v333
        %v373 = vmul.f32 %v238, %v333
        %v374 = vmul.f32 %v239, %v333
        %v375 = vmul.f32 %v240, %v333
        %v376 = vmul.f32 %v241, %v333
        %v377 = vmul.f32 %v242, %v333
        %v378 = vmul.f32 %v243, %v333
        %v379 = vmul.f32 %v244, %v333
        %v380 = vmul.f32 %v245, %v333
        %v381 = vmul.f32 %v246, %v333
        %v382 = vmul.f32 %v247, %v333
        %v383 = vmul.f32 %v248, %v333
        %v384 = vmul.f32 %v249, %v333
        %v385 = vmul.f32 %v250, %v333
        %v386 = vmul.f32 %v251, %v333
        %v387 = vmul.f32 %v252, %v333
        %v388 = vmul.f32 %v253, %v333
        %v389 = vmul.f32 %v254, %v333
        %v390 = vmul.f32 %v255, %v333
        %v391 = vmul.f32 %v256, %v333
        %v392 = vmul.f32 %v257, %v333
        %v393 = vmul.f32 %v258, %v333
        %v394 = vmul.f32 %v259, %v333
        %v395 = vmul.f32 %v260, %v333
        %v396 = vmul.f32 %v261, %v333
        %v397 = vmul.f32 %v262, %v333
        %v398 = vmul.f32 %v263, %v333
        %v399 = vmul.f32 %v264, %v333
        %v400 = vmul.f32 %v265, %v333
        %v401 = vmul.f32 %v266, %v333
        %v402 = vmul.f32 %v267, %v333
        %v403 = vmul.f32 %v268, %v333
        %v404 = vmul.f32 %v269, %v333
        %v405 = vmul.f32 %v270, %v333
        %v406 = vmul.f32 %v271, %v333
        %v407 = vmul.f32 %v272, %v333
        %v408 = vmul.f32 %v273, %v333
        %v409 = vmul.f32 %v274, %v333
        %v410 = vmul.f32 %v275, %v333
        %v411 = vmul.f32 %v276, %v333
        %v412 = vmul.f32 %v277, %v333
        %v413 = vmul.f32 %v278, %v333
        %v414 = vmul.f32 %v279, %v333
        %v415 = vmul.f32 %v280, %v333
        %v416 = vmul.f32 %v281, %v333
        %v417 = vmul.f32 %v282, %v333
        %v418 = vmul.f32 %v283, %v333
        %v419 = vmul.f32 %v284, %v333
        %v420 = vmul.f32 %v285, %v333
        %v421 = vmul.f32 %v286, %v333
        %v422 = vmul.f32 %v287, %v333
        %v423 = vmul.f32 %v288, %v333
        %v424 = vmul.f32 %v289, %v333
        %v425 = vmul.f32 %v290, %v333
        %v426 = vmul.f32 %v291, %v333
        %v427 = vmul.f32 %v292, %v333
        %v428 = vmul.f32 %v293, %v333
        %v429 = vmul.f32 %v294, %v333
        %v430 = vmul.f32 %v295, %v333
        %v431 = vmul.f32 %v296, %v333
        %v432 = vmul.f32 %v297, %v333
        %v433 = vmul.f32 %v298, %v333
        %v434 = vmul.f32 %v299, %v333
        %v435 = vmul.f32 %v300, %v333
        %v436 = vmul.f32 %v301, %v333
        %v437 = vmul.f32 %v302, %v333
        %v438 = vmul.f32 %v303, %v333
        %v439 = vmul.f32 %v304, %v333
        %v440 = vmul.f32 %v305, %v333
        %v441 = vmul.f32 %v306, %v333
        %v442 = vmul.f32 %v307, %v333
        %v443 = vmul.f32 %v308, %v333
        %v444 = vmul.f32 %v309, %v333
        %v445 = vmul.f32 %v310, %v333
        %v446 = vmul.f32 %v311, %v333
        %v447 = vmul.f32 %v312, %v333
        %v448 = vmul.f32 %v313, %v333
        %v449 = vmul.f32 %v314, %v333
        %v450 = vmul.f32 %v315, %v333
        %v451 = vmul.f32 %v316, %v333
        %v452 = vmul.f32 %v317, %v333
        %v453 = vmul.f32 %v318, %v333
        %v454 = vmul.f32 %v319, %v333
        %v455 = vmul.f32 %v320, %v333
        %v456 = vmul.f32 %v321, %v333
        %v457 = vmul.f32 %v322, %v333
        %v458 = vmul.f32 %v323, %v333
        %v459 = vmul.f32 %v324, %v333
        %v460 = vmul.f32 %v325, %v333
        %v461 = vmul.f32 %v326, %v333
        %v462 = vmul.f32 %v327, %v333
        %vm463 = vcmask 244736
        %v464 = vsel %vm463, %v335, 0.0
        %465 = vadd.xlane.f32.xlu0 %v464
        %v466 = vpop.xlane.xlu0 %465
        %v467 = vsel %vm463, %v336, 0.0
        %468 = vadd.xlane.f32.xlu0 %v467
        %v469 = vpop.xlane.xlu0 %468
        %v470 = vsel %vm463, %v337, 0.0
        %471 = vadd.xlane.f32.xlu0 %v470
        %v472 = vpop.xlane.xlu0 %471
        %v473 = vsel %vm463, %v338, 0.0
        %474 = vadd.xlane.f32.xlu0 %v473
        %v475 = vpop.xlane.xlu0 %474
        %v476 = vsel %vm463, %v339, 0.0
        %477 = vadd.xlane.f32.xlu0 %v476
        %v478 = vpop.xlane.xlu0 %477
        %v479 = vsel %vm463, %v340, 0.0
        %480 = vadd.xlane.f32.xlu0 %v479
        %v481 = vpop.xlane.xlu0 %480
        %v482 = vsel %vm463, %v341, 0.0
        %483 = vadd.xlane.f32.xlu0 %v482
        %v484 = vpop.xlane.xlu0 %483
        %v485 = vsel %vm463, %v342, 0.0
        %486 = vadd.xlane.f32.xlu0 %v485
        %v487 = vpop.xlane.xlu0 %486
        %v488 = vsel %vm463, %v343, 0.0
        %489 = vadd.xlane.f32.xlu0 %v488
        %v490 = vpop.xlane.xlu0 %489
        %v491 = vsel %vm463, %v344, 0.0
        %492 = vadd.xlane.f32.xlu0 %v491
        %v493 = vpop.xlane.xlu0 %492
        %v494 = vsel %vm463, %v345, 0.0
        %495 = vadd.xlane.f32.xlu0 %v494
        %v496 = vpop.xlane.xlu0 %495
        %v497 = vsel %vm463, %v346, 0.0
        %498 = vadd.xlane.f32.xlu0 %v497
        %v499 = vpop.xlane.xlu0 %498
        %v500 = vsel %vm463, %v347, 0.0
        %501 = vadd.xlane.f32.xlu0 %v500
        %v502 = vpop.xlane.xlu0 %501
        %v503 = vsel %vm463, %v348, 0.0
        %504 = vadd.xlane.f32.xlu0 %v503
        %v505 = vpop.xlane.xlu0 %504
        %v506 = vsel %vm463, %v349, 0.0
        %507 = vadd.xlane.f32.xlu0 %v506
        %v508 = vpop.xlane.xlu0 %507
        %v509 = vsel %vm463, %v350, 0.0
        %510 = vadd.xlane.f32.xlu0 %v509
        %v511 = vpop.xlane.xlu0 %510
        %v512 = vsel %vm463, %v351, 0.0
        %513 = vadd.xlane.f32.xlu0 %v512
        %v514 = vpop.xlane.xlu0 %513
        %v515 = vsel %vm463, %v352, 0.0
        %516 = vadd.xlane.f32.xlu0 %v515
        %v517 = vpop.xlane.xlu0 %516
        %v518 = vsel %vm463, %v353, 0.0
        %519 = vadd.xlane.f32.xlu0 %v518
        %v520 = vpop.xlane.xlu0 %519
        %v521 = vsel %vm463, %v354, 0.0
        %522 = vadd.xlane.f32.xlu0 %v521
        %v523 = vpop.xlane.xlu0 %522
        %v524 = vsel %vm463, %v355, 0.0
        %525 = vadd.xlane.f32.xlu0 %v524
        %v526 = vpop.xlane.xlu0 %525
        %v527 = vsel %vm463, %v356, 0.0
        %528 = vadd.xlane.f32.xlu0 %v527
        %v529 = vpop.xlane.xlu0 %528
        %v530 = vsel %vm463, %v357, 0.0
        %531 = vadd.xlane.f32.xlu0 %v530
        %v532 = vpop.xlane.xlu0 %531
        %v533 = vsel %vm463, %v358, 0.0
        %534 = vadd.xlane.f32.xlu0 %v533
        %v535 = vpop.xlane.xlu0 %534
        %v536 = vsel %vm463, %v359, 0.0
        %537 = vadd.xlane.f32.xlu0 %v536
        %v538 = vpop.xlane.xlu0 %537
        %v539 = vsel %vm463, %v360, 0.0
        %540 = vadd.xlane.f32.xlu0 %v539
        %v541 = vpop.xlane.xlu0 %540
        %v542 = vsel %vm463, %v361, 0.0
        %543 = vadd.xlane.f32.xlu0 %v542
        %v544 = vpop.xlane.xlu0 %543
        %v545 = vsel %vm463, %v362, 0.0
        %546 = vadd.xlane.f32.xlu0 %v545
        %v547 = vpop.xlane.xlu0 %546
        %v548 = vsel %vm463, %v363, 0.0
        %549 = vadd.xlane.f32.xlu0 %v548
        %v550 = vpop.xlane.xlu0 %549
        %v551 = vsel %vm463, %v364, 0.0
        %552 = vadd.xlane.f32.xlu0 %v551
        %v553 = vpop.xlane.xlu0 %552
        %v554 = vsel %vm463, %v365, 0.0
        %555 = vadd.xlane.f32.xlu0 %v554
        %v556 = vpop.xlane.xlu0 %555
        %v557 = vsel %vm463, %v366, 0.0
        %558 = vadd.xlane.f32.xlu0 %v557
        %v559 = vpop.xlane.xlu0 %558
        %v560 = vsel %vm463, %v367, 0.0
        %561 = vadd.xlane.f32.xlu0 %v560
        %v562 = vpop.xlane.xlu0 %561
        %v563 = vsel %vm463, %v368, 0.0
        %564 = vadd.xlane.f32.xlu0 %v563
        %v565 = vpop.xlane.xlu0 %564
        %v566 = vsel %vm463, %v369, 0.0
        %567 = vadd.xlane.f32.xlu0 %v566
        %v568 = vpop.xlane.xlu0 %567
        %v569 = vsel %vm463, %v370, 0.0
        %570 = vadd.xlane.f32.xlu0 %v569
        %v571 = vpop.xlane.xlu0 %570
        %v572 = vsel %vm463, %v371, 0.0
        %573 = vadd.xlane.f32.xlu0 %v572
        %v574 = vpop.xlane.xlu0 %573
        %v575 = vsel %vm463, %v372, 0.0
        %576 = vadd.xlane.f32.xlu0 %v575
        %v577 = vpop.xlane.xlu0 %576
        %v578 = vsel %vm463, %v373, 0.0
        %579 = vadd.xlane.f32.xlu0 %v578
        %v580 = vpop.xlane.xlu0 %579
        %v581 = vsel %vm463, %v374, 0.0
        %582 = vadd.xlane.f32.xlu0 %v581
        %v583 = vpop.xlane.xlu0 %582
        %v584 = vsel %vm463, %v375, 0.0
        %585 = vadd.xlane.f32.xlu0 %v584
        %v586 = vpop.xlane.xlu0 %585
        %v587 = vsel %vm463, %v376, 0.0
        %588 = vadd.xlane.f32.xlu0 %v587
        %v589 = vpop.xlane.xlu0 %588
        %v590 = vsel %vm463, %v377, 0.0
        %591 = vadd.xlane.f32.xlu0 %v590
        %v592 = vpop.xlane.xlu0 %591
        %v593 = vsel %vm463, %v378, 0.0
        %594 = vadd.xlane.f32.xlu0 %v593
        %v595 = vpop.xlane.xlu0 %594
        %v596 = vsel %vm463, %v379, 0.0
        %597 = vadd.xlane.f32.xlu0 %v596
        %v598 = vpop.xlane.xlu0 %597
        %v599 = vsel %vm463, %v380, 0.0
        %600 = vadd.xlane.f32.xlu0 %v599
        %v601 = vpop.xlane.xlu0 %600
        %v602 = vsel %vm463, %v381, 0.0
        %603 = vadd.xlane.f32.xlu0 %v602
        %v604 = vpop.xlane.xlu0 %603
        %v605 = vsel %vm463, %v382, 0.0
        %606 = vadd.xlane.f32.xlu0 %v605
        %v607 = vpop.xlane.xlu0 %606
        %v608 = vsel %vm463, %v383, 0.0
        %609 = vadd.xlane.f32.xlu0 %v608
        %v610 = vpop.xlane.xlu0 %609
        %v611 = vsel %vm463, %v384, 0.0
        %612 = vadd.xlane.f32.xlu0 %v611
        %v613 = vpop.xlane.xlu0 %612
        %v614 = vsel %vm463, %v385, 0.0
        %615 = vadd.xlane.f32.xlu0 %v614
        %v616 = vpop.xlane.xlu0 %615
        %v617 = vsel %vm463, %v386, 0.0
        %618 = vadd.xlane.f32.xlu0 %v617
        %v619 = vpop.xlane.xlu0 %618
        %v620 = vsel %vm463, %v387, 0.0
        %621 = vadd.xlane.f32.xlu0 %v620
        %v622 = vpop.xlane.xlu0 %621
        %v623 = vsel %vm463, %v388, 0.0
        %624 = vadd.xlane.f32.xlu0 %v623
        %v625 = vpop.xlane.xlu0 %624
        %v626 = vsel %vm463, %v389, 0.0
        %627 = vadd.xlane.f32.xlu0 %v626
        %v628 = vpop.xlane.xlu0 %627
        %v629 = vsel %vm463, %v390, 0.0
        %630 = vadd.xlane.f32.xlu0 %v629
        %v631 = vpop.xlane.xlu0 %630
        %v632 = vsel %vm463, %v391, 0.0
        %633 = vadd.xlane.f32.xlu0 %v632
        %v634 = vpop.xlane.xlu0 %633
        %v635 = vsel %vm463, %v392, 0.0
        %636 = vadd.xlane.f32.xlu0 %v635
        %v637 = vpop.xlane.xlu0 %636
        %v638 = vsel %vm463, %v393, 0.0
        %639 = vadd.xlane.f32.xlu0 %v638
        %v640 = vpop.xlane.xlu0 %639
        %v641 = vsel %vm463, %v394, 0.0
        %642 = vadd.xlane.f32.xlu0 %v641
        %v643 = vpop.xlane.xlu0 %642
        %v644 = vsel %vm463, %v395, 0.0
        %645 = vadd.xlane.f32.xlu0 %v644
        %v646 = vpop.xlane.xlu0 %645
        %v647 = vsel %vm463, %v396, 0.0
        %648 = vadd.xlane.f32.xlu0 %v647
        %v649 = vpop.xlane.xlu0 %648
        %v650 = vsel %vm463, %v397, 0.0
        %651 = vadd.xlane.f32.xlu0 %v650
        %v652 = vpop.xlane.xlu0 %651
        %v653 = vsel %vm463, %v398, 0.0
        %654 = vadd.xlane.f32.xlu0 %v653
        %v655 = vpop.xlane.xlu0 %654
        %v656 = vsel %vm463, %v399, 0.0
        %657 = vadd.xlane.f32.xlu0 %v656
        %v658 = vpop.xlane.xlu0 %657
        %v659 = vsel %vm463, %v400, 0.0
        %660 = vadd.xlane.f32.xlu0 %v659
        %v661 = vpop.xlane.xlu0 %660
        %v662 = vsel %vm463, %v401, 0.0
        %663 = vadd.xlane.f32.xlu0 %v662
        %v664 = vpop.xlane.xlu0 %663
        %v665 = vsel %vm463, %v402, 0.0
        %666 = vadd.xlane.f32.xlu0 %v665
        %v667 = vpop.xlane.xlu0 %666
        %v668 = vsel %vm463, %v403, 0.0
        %669 = vadd.xlane.f32.xlu0 %v668
        %v670 = vpop.xlane.xlu0 %669
        %v671 = vsel %vm463, %v404, 0.0
        %672 = vadd.xlane.f32.xlu0 %v671
        %v673 = vpop.xlane.xlu0 %672
        %v674 = vsel %vm463, %v405, 0.0
        %675 = vadd.xlane.f32.xlu0 %v674
        %v676 = vpop.xlane.xlu0 %675
        %v677 = vsel %vm463, %v406, 0.0
        %678 = vadd.xlane.f32.xlu0 %v677
        %v679 = vpop.xlane.xlu0 %678
        %v680 = vsel %vm463, %v407, 0.0
        %681 = vadd.xlane.f32.xlu0 %v680
        %v682 = vpop.xlane.xlu0 %681
        %v683 = vsel %vm463, %v408, 0.0
        %684 = vadd.xlane.f32.xlu0 %v683
        %v685 = vpop.xlane.xlu0 %684
        %v686 = vsel %vm463, %v409, 0.0
        %687 = vadd.xlane.f32.xlu0 %v686
        %v688 = vpop.xlane.xlu0 %687
        %v689 = vsel %vm463, %v410, 0.0
        %690 = vadd.xlane.f32.xlu0 %v689
        %v691 = vpop.xlane.xlu0 %690
        %v692 = vsel %vm463, %v411, 0.0
        %693 = vadd.xlane.f32.xlu0 %v692
        %v694 = vpop.xlane.xlu0 %693
        %v695 = vsel %vm463, %v412, 0.0
        %696 = vadd.xlane.f32.xlu0 %v695
        %v697 = vpop.xlane.xlu0 %696
        %v698 = vsel %vm463, %v413, 0.0
        %699 = vadd.xlane.f32.xlu0 %v698
        %v700 = vpop.xlane.xlu0 %699
        %v701 = vsel %vm463, %v414, 0.0
        %702 = vadd.xlane.f32.xlu0 %v701
        %v703 = vpop.xlane.xlu0 %702
        %v704 = vsel %vm463, %v415, 0.0
        %705 = vadd.xlane.f32.xlu0 %v704
        %v706 = vpop.xlane.xlu0 %705
        %v707 = vsel %vm463, %v416, 0.0
        %708 = vadd.xlane.f32.xlu0 %v707
        %v709 = vpop.xlane.xlu0 %708
        %v710 = vsel %vm463, %v417, 0.0
        %711 = vadd.xlane.f32.xlu0 %v710
        %v712 = vpop.xlane.xlu0 %711
        %v713 = vsel %vm463, %v418, 0.0
        %714 = vadd.xlane.f32.xlu0 %v713
        %v715 = vpop.xlane.xlu0 %714
        %v716 = vsel %vm463, %v419, 0.0
        %717 = vadd.xlane.f32.xlu0 %v716
        %v718 = vpop.xlane.xlu0 %717
        %v719 = vsel %vm463, %v420, 0.0
        %720 = vadd.xlane.f32.xlu0 %v719
        %v721 = vpop.xlane.xlu0 %720
        %v722 = vsel %vm463, %v421, 0.0
        %723 = vadd.xlane.f32.xlu0 %v722
        %v724 = vpop.xlane.xlu0 %723
        %v725 = vsel %vm463, %v422, 0.0
        %726 = vadd.xlane.f32.xlu0 %v725
        %v727 = vpop.xlane.xlu0 %726
        %v728 = vsel %vm463, %v423, 0.0
        %729 = vadd.xlane.f32.xlu0 %v728
        %v730 = vpop.xlane.xlu0 %729
        %v731 = vsel %vm463, %v424, 0.0
        %732 = vadd.xlane.f32.xlu0 %v731
        %v733 = vpop.xlane.xlu0 %732
        %v734 = vsel %vm463, %v425, 0.0
        %735 = vadd.xlane.f32.xlu0 %v734
        %v736 = vpop.xlane.xlu0 %735
        %v737 = vsel %vm463, %v426, 0.0
        %738 = vadd.xlane.f32.xlu0 %v737
        %v739 = vpop.xlane.xlu0 %738
        %v740 = vsel %vm463, %v427, 0.0
        %741 = vadd.xlane.f32.xlu0 %v740
        %v742 = vpop.xlane.xlu0 %741
        %v743 = vsel %vm463, %v428, 0.0
        %744 = vadd.xlane.f32.xlu0 %v743
        %v745 = vpop.xlane.xlu0 %744
        %v746 = vsel %vm463, %v429, 0.0
        %747 = vadd.xlane.f32.xlu0 %v746
        %v748 = vpop.xlane.xlu0 %747
        %v749 = vsel %vm463, %v430, 0.0
        %750 = vadd.xlane.f32.xlu0 %v749
        %v751 = vpop.xlane.xlu0 %750
        %v752 = vsel %vm463, %v431, 0.0
        %753 = vadd.xlane.f32.xlu0 %v752
        %v754 = vpop.xlane.xlu0 %753
        %v755 = vsel %vm463, %v432, 0.0
        %756 = vadd.xlane.f32.xlu0 %v755
        %v757 = vpop.xlane.xlu0 %756
        %v758 = vsel %vm463, %v433, 0.0
        %759 = vadd.xlane.f32.xlu0 %v758
        %v760 = vpop.xlane.xlu0 %759
        %v761 = vsel %vm463, %v434, 0.0
        %762 = vadd.xlane.f32.xlu0 %v761
        %v763 = vpop.xlane.xlu0 %762
        %v764 = vsel %vm463, %v435, 0.0
        %765 = vadd.xlane.f32.xlu0 %v764
        %v766 = vpop.xlane.xlu0 %765
        %v767 = vsel %vm463, %v436, 0.0
        %768 = vadd.xlane.f32.xlu0 %v767
        %v769 = vpop.xlane.xlu0 %768
        %v770 = vsel %vm463, %v437, 0.0
        %771 = vadd.xlane.f32.xlu0 %v770
        %v772 = vpop.xlane.xlu0 %771
        %v773 = vsel %vm463, %v438, 0.0
        %774 = vadd.xlane.f32.xlu0 %v773
        %v775 = vpop.xlane.xlu0 %774
        %v776 = vsel %vm463, %v439, 0.0
        %777 = vadd.xlane.f32.xlu0 %v776
        %v778 = vpop.xlane.xlu0 %777
        %v779 = vsel %vm463, %v440, 0.0
        %780 = vadd.xlane.f32.xlu0 %v779
        %v781 = vpop.xlane.xlu0 %780
        %v782 = vsel %vm463, %v441, 0.0
        %783 = vadd.xlane.f32.xlu0 %v782
        %v784 = vpop.xlane.xlu0 %783
        %v785 = vsel %vm463, %v442, 0.0
        %786 = vadd.xlane.f32.xlu0 %v785
        %v787 = vpop.xlane.xlu0 %786
        %v788 = vsel %vm463, %v443, 0.0
        %789 = vadd.xlane.f32.xlu0 %v788
        %v790 = vpop.xlane.xlu0 %789
        %v791 = vsel %vm463, %v444, 0.0
        %792 = vadd.xlane.f32.xlu0 %v791
        %v793 = vpop.xlane.xlu0 %792
        %v794 = vsel %vm463, %v445, 0.0
        %795 = vadd.xlane.f32.xlu0 %v794
        %v796 = vpop.xlane.xlu0 %795
        %v797 = vsel %vm463, %v446, 0.0
        %798 = vadd.xlane.f32.xlu0 %v797
        %v799 = vpop.xlane.xlu0 %798
        %v800 = vsel %vm463, %v447, 0.0
        %801 = vadd.xlane.f32.xlu0 %v800
        %v802 = vpop.xlane.xlu0 %801
        %v803 = vsel %vm463, %v448, 0.0
        %804 = vadd.xlane.f32.xlu0 %v803
        %v805 = vpop.xlane.xlu0 %804
        %v806 = vsel %vm463, %v449, 0.0
        %807 = vadd.xlane.f32.xlu0 %v806
        %v808 = vpop.xlane.xlu0 %807
        %v809 = vsel %vm463, %v450, 0.0
        %810 = vadd.xlane.f32.xlu0 %v809
        %v811 = vpop.xlane.xlu0 %810
        %v812 = vsel %vm463, %v451, 0.0
        %813 = vadd.xlane.f32.xlu0 %v812
        %v814 = vpop.xlane.xlu0 %813
        %v815 = vsel %vm463, %v452, 0.0
        %816 = vadd.xlane.f32.xlu0 %v815
        %v817 = vpop.xlane.xlu0 %816
        %v818 = vsel %vm463, %v453, 0.0
        %819 = vadd.xlane.f32.xlu0 %v818
        %v820 = vpop.xlane.xlu0 %819
        %v821 = vsel %vm463, %v454, 0.0
        %822 = vadd.xlane.f32.xlu0 %v821
        %v823 = vpop.xlane.xlu0 %822
        %v824 = vsel %vm463, %v455, 0.0
        %825 = vadd.xlane.f32.xlu0 %v824
        %v826 = vpop.xlane.xlu0 %825
        %v827 = vsel %vm463, %v456, 0.0
        %828 = vadd.xlane.f32.xlu0 %v827
        %v829 = vpop.xlane.xlu0 %828
        %v830 = vsel %vm463, %v457, 0.0
        %831 = vadd.xlane.f32.xlu0 %v830
        %v832 = vpop.xlane.xlu0 %831
        %v833 = vsel %vm463, %v458, 0.0
        %834 = vadd.xlane.f32.xlu0 %v833
        %v835 = vpop.xlane.xlu0 %834
        %v836 = vsel %vm463, %v459, 0.0
        %837 = vadd.xlane.f32.xlu0 %v836
        %v838 = vpop.xlane.xlu0 %837
        %v839 = vsel %vm463, %v460, 0.0
        %840 = vadd.xlane.f32.xlu0 %v839
        %v841 = vpop.xlane.xlu0 %840
        %v842 = vsel %vm463, %v461, 0.0
        %843 = vadd.xlane.f32.xlu0 %v842
        %v844 = vpop.xlane.xlu0 %843
        %v845 = vsel %vm463, %v462, 0.0
        %846 = vadd.xlane.f32.xlu0 %v845
        %v847 = vpop.xlane.xlu0 %846
        %s848 = sld [smem:[#allocation2]]
        %v849 = vstv %s848
        %v850 = vadd.f32 %v466, %v849
        %v851 = vadd.f32 %v469, %v849
        %v852 = vadd.f32 %v472, %v849
        %v853 = vadd.f32 %v475, %v849
        %v854 = vadd.f32 %v478, %v849
        %v855 = vadd.f32 %v481, %v849
        %v856 = vadd.f32 %v484, %v849
        %v857 = vadd.f32 %v487, %v849
        %v858 = vadd.f32 %v490, %v849
        %v859 = vadd.f32 %v493, %v849
        %v860 = vadd.f32 %v496, %v849
        %v861 = vadd.f32 %v499, %v849
        %v862 = vadd.f32 %v502, %v849
        %v863 = vadd.f32 %v505, %v849
        %v864 = vadd.f32 %v508, %v849
        %v865 = vadd.f32 %v511, %v849
        %v866 = vadd.f32 %v514, %v849
        %v867 = vadd.f32 %v517, %v849
        %v868 = vadd.f32 %v520, %v849
        %v869 = vadd.f32 %v523, %v849
        %v870 = vadd.f32 %v526, %v849
        %v871 = vadd.f32 %v529, %v849
        %v872 = vadd.f32 %v532, %v849
        %v873 = vadd.f32 %v535, %v849
        %v874 = vadd.f32 %v538, %v849
        %v875 = vadd.f32 %v541, %v849
        %v876 = vadd.f32 %v544, %v849
        %v877 = vadd.f32 %v547, %v849
        %v878 = vadd.f32 %v550, %v849
        %v879 = vadd.f32 %v553, %v849
        %v880 = vadd.f32 %v556, %v849
        %v881 = vadd.f32 %v559, %v849
        %v882 = vadd.f32 %v562, %v849
        %v883 = vadd.f32 %v565, %v849
        %v884 = vadd.f32 %v568, %v849
        %v885 = vadd.f32 %v571, %v849
        %v886 = vadd.f32 %v574, %v849
        %v887 = vadd.f32 %v577, %v849
        %v888 = vadd.f32 %v580, %v849
        %v889 = vadd.f32 %v583, %v849
        %v890 = vadd.f32 %v586, %v849
        %v891 = vadd.f32 %v589, %v849
        %v892 = vadd.f32 %v592, %v849
        %v893 = vadd.f32 %v595, %v849
        %v894 = vadd.f32 %v598, %v849
        %v895 = vadd.f32 %v601, %v849
        %v896 = vadd.f32 %v604, %v849
        %v897 = vadd.f32 %v607, %v849
        %v898 = vadd.f32 %v610, %v849
        %v899 = vadd.f32 %v613, %v849
        %v900 = vadd.f32 %v616, %v849
        %v901 = vadd.f32 %v619, %v849
        %v902 = vadd.f32 %v622, %v849
        %v903 = vadd.f32 %v625, %v849
        %v904 = vadd.f32 %v628, %v849
        %v905 = vadd.f32 %v631, %v849
        %v906 = vadd.f32 %v634, %v849
        %v907 = vadd.f32 %v637, %v849
        %v908 = vadd.f32 %v640, %v849
        %v909 = vadd.f32 %v643, %v849
        %v910 = vadd.f32 %v646, %v849
        %v911 = vadd.f32 %v649, %v849
        %v912 = vadd.f32 %v652, %v849
        %v913 = vadd.f32 %v655, %v849
        %v914 = vadd.f32 %v658, %v849
        %v915 = vadd.f32 %v661, %v849
        %v916 = vadd.f32 %v664, %v849
        %v917 = vadd.f32 %v667, %v849
        %v918 = vadd.f32 %v670, %v849
        %v919 = vadd.f32 %v673, %v849
        %v920 = vadd.f32 %v676, %v849
        %v921 = vadd.f32 %v679, %v849
        %v922 = vadd.f32 %v682, %v849
        %v923 = vadd.f32 %v685, %v849
        %v924 = vadd.f32 %v688, %v849
        %v925 = vadd.f32 %v691, %v849
        %v926 = vadd.f32 %v694, %v849
        %v927 = vadd.f32 %v697, %v849
        %v928 = vadd.f32 %v700, %v849
        %v929 = vadd.f32 %v703, %v849
        %v930 = vadd.f32 %v706, %v849
        %v931 = vadd.f32 %v709, %v849
        %v932 = vadd.f32 %v712, %v849
        %v933 = vadd.f32 %v715, %v849
        %v934 = vadd.f32 %v718, %v849
        %v935 = vadd.f32 %v721, %v849
        %v936 = vadd.f32 %v724, %v849
        %v937 = vadd.f32 %v727, %v849
        %v938 = vadd.f32 %v730, %v849
        %v939 = vadd.f32 %v733, %v849
        %v940 = vadd.f32 %v736, %v849
        %v941 = vadd.f32 %v739, %v849
        %v942 = vadd.f32 %v742, %v849
        %v943 = vadd.f32 %v745, %v849
        %v944 = vadd.f32 %v748, %v849
        %v945 = vadd.f32 %v751, %v849
        %v946 = vadd.f32 %v754, %v849
        %v947 = vadd.f32 %v757, %v849
        %v948 = vadd.f32 %v760, %v849
        %v949 = vadd.f32 %v763, %v849
        %v950 = vadd.f32 %v766, %v849
        %v951 = vadd.f32 %v769, %v849
        %v952 = vadd.f32 %v772, %v849
        %v953 = vadd.f32 %v775, %v849
        %v954 = vadd.f32 %v778, %v849
        %v955 = vadd.f32 %v781, %v849
        %v956 = vadd.f32 %v784, %v849
        %v957 = vadd.f32 %v787, %v849
        %v958 = vadd.f32 %v790, %v849
        %v959 = vadd.f32 %v793, %v849
        %v960 = vadd.f32 %v796, %v849
        %v961 = vadd.f32 %v799, %v849
        %v962 = vadd.f32 %v802, %v849
        %v963 = vadd.f32 %v805, %v849
        %v964 = vadd.f32 %v808, %v849
        %v965 = vadd.f32 %v811, %v849
        %v966 = vadd.f32 %v814, %v849
        %v967 = vadd.f32 %v817, %v849
        %v968 = vadd.f32 %v820, %v849
        %v969 = vadd.f32 %v823, %v849
        %v970 = vadd.f32 %v826, %v849
        %v971 = vadd.f32 %v829, %v849
        %v972 = vadd.f32 %v832, %v849
        %v973 = vadd.f32 %v835, %v849
        %v974 = vadd.f32 %v838, %v849
        %v975 = vadd.f32 %v841, %v849
        %v976 = vadd.f32 %v844, %v849
        %v977 = vadd.f32 %v847, %v849
        %v978 = vxor.u32 %v850, 2147483648
        %v979 = vxor.u32 %v851, 2147483648
        %v980 = vxor.u32 %v852, 2147483648
        %v981 = vxor.u32 %v853, 2147483648
        %v982 = vxor.u32 %v854, 2147483648
        %v983 = vxor.u32 %v855, 2147483648
        %v984 = vxor.u32 %v856, 2147483648
        %v985 = vxor.u32 %v857, 2147483648
        %v986 = vxor.u32 %v858, 2147483648
        %v987 = vxor.u32 %v859, 2147483648
        %v988 = vxor.u32 %v860, 2147483648
        %v989 = vxor.u32 %v861, 2147483648
        %v990 = vxor.u32 %v862, 2147483648
        %v991 = vxor.u32 %v863, 2147483648
        %v992 = vxor.u32 %v864, 2147483648
        %v993 = vxor.u32 %v865, 2147483648
        %v994 = vxor.u32 %v866, 2147483648
        %v995 = vxor.u32 %v867, 2147483648
        %v996 = vxor.u32 %v868, 2147483648
        %v997 = vxor.u32 %v869, 2147483648
        %v998 = vxor.u32 %v870, 2147483648
        %v999 = vxor.u32 %v871, 2147483648
        %v1000 = vxor.u32 %v872, 2147483648
        %v1001 = vxor.u32 %v873, 2147483648
        %v1002 = vxor.u32 %v874, 2147483648
        %v1003 = vxor.u32 %v875, 2147483648
        %v1004 = vxor.u32 %v876, 2147483648
        %v1005 = vxor.u32 %v877, 2147483648
        %v1006 = vxor.u32 %v878, 2147483648
        %v1007 = vxor.u32 %v879, 2147483648
        %v1008 = vxor.u32 %v880, 2147483648
        %v1009 = vxor.u32 %v881, 2147483648
        %v1010 = vxor.u32 %v882, 2147483648
        %v1011 = vxor.u32 %v883, 2147483648
        %v1012 = vxor.u32 %v884, 2147483648
        %v1013 = vxor.u32 %v885, 2147483648
        %v1014 = vxor.u32 %v886, 2147483648
        %v1015 = vxor.u32 %v887, 2147483648
        %v1016 = vxor.u32 %v888, 2147483648
        %v1017 = vxor.u32 %v889, 2147483648
        %v1018 = vxor.u32 %v890, 2147483648
        %v1019 = vxor.u32 %v891, 2147483648
        %v1020 = vxor.u32 %v892, 2147483648
        %v1021 = vxor.u32 %v893, 2147483648
        %v1022 = vxor.u32 %v894, 2147483648
        %v1023 = vxor.u32 %v895, 2147483648
        %v1024 = vxor.u32 %v896, 2147483648
        %v1025 = vxor.u32 %v897, 2147483648
        %v1026 = vxor.u32 %v898, 2147483648
        %v1027 = vxor.u32 %v899, 2147483648
        %v1028 = vxor.u32 %v900, 2147483648
        %v1029 = vxor.u32 %v901, 2147483648
        %v1030 = vxor.u32 %v902, 2147483648
        %v1031 = vxor.u32 %v903, 2147483648
        %v1032 = vxor.u32 %v904, 2147483648
        %v1033 = vxor.u32 %v905, 2147483648
        %v1034 = vxor.u32 %v906, 2147483648
        %v1035 = vxor.u32 %v907, 2147483648
        %v1036 = vxor.u32 %v908, 2147483648
        %v1037 = vxor.u32 %v909, 2147483648
        %v1038 = vxor.u32 %v910, 2147483648
        %v1039 = vxor.u32 %v911, 2147483648
        %v1040 = vxor.u32 %v912, 2147483648
        %v1041 = vxor.u32 %v913, 2147483648
        %v1042 = vxor.u32 %v914, 2147483648
        %v1043 = vxor.u32 %v915, 2147483648
        %v1044 = vxor.u32 %v916, 2147483648
        %v1045 = vxor.u32 %v917, 2147483648
        %v1046 = vxor.u32 %v918, 2147483648
        %v1047 = vxor.u32 %v919, 2147483648
        %v1048 = vxor.u32 %v920, 2147483648
        %v1049 = vxor.u32 %v921, 2147483648
        %v1050 = vxor.u32 %v922, 2147483648
        %v1051 = vxor.u32 %v923, 2147483648
        %v1052 = vxor.u32 %v924, 2147483648
        %v1053 = vxor.u32 %v925, 2147483648
        %v1054 = vxor.u32 %v926, 2147483648
        %v1055 = vxor.u32 %v927, 2147483648
        %v1056 = vxor.u32 %v928, 2147483648
        %v1057 = vxor.u32 %v929, 2147483648
        %v1058 = vxor.u32 %v930, 2147483648
        %v1059 = vxor.u32 %v931, 2147483648
        %v1060 = vxor.u32 %v932, 2147483648
        %v1061 = vxor.u32 %v933, 2147483648
        %v1062 = vxor.u32 %v934, 2147483648
        %v1063 = vxor.u32 %v935, 2147483648
        %v1064 = vxor.u32 %v936, 2147483648
        %v1065 = vxor.u32 %v937, 2147483648
        %v1066 = vxor.u32 %v938, 2147483648
        %v1067 = vxor.u32 %v939, 2147483648
        %v1068 = vxor.u32 %v940, 2147483648
        %v1069 = vxor.u32 %v941, 2147483648
        %v1070 = vxor.u32 %v942, 2147483648
        %v1071 = vxor.u32 %v943, 2147483648
        %v1072 = vxor.u32 %v944, 2147483648
        %v1073 = vxor.u32 %v945, 2147483648
        %v1074 = vxor.u32 %v946, 2147483648
        %v1075 = vxor.u32 %v947, 2147483648
        %v1076 = vxor.u32 %v948, 2147483648
        %v1077 = vxor.u32 %v949, 2147483648
        %v1078 = vxor.u32 %v950, 2147483648
        %v1079 = vxor.u32 %v951, 2147483648
        %v1080 = vxor.u32 %v952, 2147483648
        %v1081 = vxor.u32 %v953, 2147483648
        %v1082 = vxor.u32 %v954, 2147483648
        %v1083 = vxor.u32 %v955, 2147483648
        %v1084 = vxor.u32 %v956, 2147483648
        %v1085 = vxor.u32 %v957, 2147483648
        %v1086 = vxor.u32 %v958, 2147483648
        %v1087 = vxor.u32 %v959, 2147483648
        %v1088 = vxor.u32 %v960, 2147483648
        %v1089 = vxor.u32 %v961, 2147483648
        %v1090 = vxor.u32 %v962, 2147483648
        %v1091 = vxor.u32 %v963, 2147483648
        %v1092 = vxor.u32 %v964, 2147483648
        %v1093 = vxor.u32 %v965, 2147483648
        %v1094 = vxor.u32 %v966, 2147483648
        %v1095 = vxor.u32 %v967, 2147483648
        %v1096 = vxor.u32 %v968, 2147483648
        %v1097 = vxor.u32 %v969, 2147483648
        %v1098 = vxor.u32 %v970, 2147483648
        %v1099 = vxor.u32 %v971, 2147483648
        %v1100 = vxor.u32 %v972, 2147483648
        %v1101 = vxor.u32 %v973, 2147483648
        %v1102 = vxor.u32 %v974, 2147483648
        %v1103 = vxor.u32 %v975, 2147483648
        %v1104 = vxor.u32 %v976, 2147483648
        %v1105 = vxor.u32 %v977, 2147483648
        %v1106 = vmul.f32 %v978, 1.442695
        %v1107 = vpow.pop %v1106
        %v1108 = vmul.f32 %v979, 1.442695
        %v1109 = vpow.pop %v1108
        %v1110 = vmul.f32 %v980, 1.442695
        %v1111 = vpow.pop %v1110
        %v1112 = vmul.f32 %v981, 1.442695
        %v1113 = vpow.pop %v1112
        %v1114 = vmul.f32 %v982, 1.442695
        %v1115 = vpow.pop %v1114
        %v1116 = vmul.f32 %v983, 1.442695
        %v1117 = vpow.pop %v1116
        %v1118 = vmul.f32 %v984, 1.442695
        %v1119 = vpow.pop %v1118
        %v1120 = vmul.f32 %v985, 1.442695
        %v1121 = vpow.pop %v1120
        %v1122 = vmul.f32 %v986, 1.442695
        %v1123 = vpow.pop %v1122
        %v1124 = vmul.f32 %v987, 1.442695
        %v1125 = vpow.pop %v1124
        %v1126 = vmul.f32 %v988, 1.442695
        %v1127 = vpow.pop %v1126
        %v1128 = vmul.f32 %v989, 1.442695
        %v1129 = vpow.pop %v1128
        %v1130 = vmul.f32 %v990, 1.442695
        %v1131 = vpow.pop %v1130
        %v1132 = vmul.f32 %v991, 1.442695
        %v1133 = vpow.pop %v1132
        %v1134 = vmul.f32 %v992, 1.442695
        %v1135 = vpow.pop %v1134
        %v1136 = vmul.f32 %v993, 1.442695
        %v1137 = vpow.pop %v1136
        %v1138 = vmul.f32 %v994, 1.442695
        %v1139 = vpow.pop %v1138
        %v1140 = vmul.f32 %v995, 1.442695
        %v1141 = vpow.pop %v1140
        %v1142 = vmul.f32 %v996, 1.442695
        %v1143 = vpow.pop %v1142
        %v1144 = vmul.f32 %v997, 1.442695
        %v1145 = vpow.pop %v1144
        %v1146 = vmul.f32 %v998, 1.442695
        %v1147 = vpow.pop %v1146
        %v1148 = vmul.f32 %v999, 1.442695
        %v1149 = vpow.pop %v1148
        %v1150 = vmul.f32 %v1000, 1.442695
        %v1151 = vpow.pop %v1150
        %v1152 = vmul.f32 %v1001, 1.442695
        %v1153 = vpow.pop %v1152
        %v1154 = vmul.f32 %v1002, 1.442695
        %v1155 = vpow.pop %v1154
        %v1156 = vmul.f32 %v1003, 1.442695
        %v1157 = vpow.pop %v1156
        %v1158 = vmul.f32 %v1004, 1.442695
        %v1159 = vpow.pop %v1158
        %v1160 = vmul.f32 %v1005, 1.442695
        %v1161 = vpow.pop %v1160
        %v1162 = vmul.f32 %v1006, 1.442695
        %v1163 = vpow.pop %v1162
        %v1164 = vmul.f32 %v1007, 1.442695
        %v1165 = vpow.pop %v1164
        %v1166 = vmul.f32 %v1008, 1.442695
        %v1167 = vpow.pop %v1166
        %v1168 = vmul.f32 %v1009, 1.442695
        %v1169 = vpow.pop %v1168
        %v1170 = vmul.f32 %v1010, 1.442695
        %v1171 = vpow.pop %v1170
        %v1172 = vmul.f32 %v1011, 1.442695
        %v1173 = vpow.pop %v1172
        %v1174 = vmul.f32 %v1012, 1.442695
        %v1175 = vpow.pop %v1174
        %v1176 = vmul.f32 %v1013, 1.442695
        %v1177 = vpow.pop %v1176
        %v1178 = vmul.f32 %v1014, 1.442695
        %v1179 = vpow.pop %v1178
        %v1180 = vmul.f32 %v1015, 1.442695
        %v1181 = vpow.pop %v1180
        %v1182 = vmul.f32 %v1016, 1.442695
        %v1183 = vpow.pop %v1182
        %v1184 = vmul.f32 %v1017, 1.442695
        %v1185 = vpow.pop %v1184
        %v1186 = vmul.f32 %v1018, 1.442695
        %v1187 = vpow.pop %v1186
        %v1188 = vmul.f32 %v1019, 1.442695
        %v1189 = vpow.pop %v1188
        %v1190 = vmul.f32 %v1020, 1.442695
        %v1191 = vpow.pop %v1190
        %v1192 = vmul.f32 %v1021, 1.442695
        %v1193 = vpow.pop %v1192
        %v1194 = vmul.f32 %v1022, 1.442695
        %v1195 = vpow.pop %v1194
        %v1196 = vmul.f32 %v1023, 1.442695
        %v1197 = vpow.pop %v1196
        %v1198 = vmul.f32 %v1024, 1.442695
        %v1199 = vpow.pop %v1198
        %v1200 = vmul.f32 %v1025, 1.442695
        %v1201 = vpow.pop %v1200
        %v1202 = vmul.f32 %v1026, 1.442695
        %v1203 = vpow.pop %v1202
        %v1204 = vmul.f32 %v1027, 1.442695
        %v1205 = vpow.pop %v1204
        %v1206 = vmul.f32 %v1028, 1.442695
        %v1207 = vpow.pop %v1206
        %v1208 = vmul.f32 %v1029, 1.442695
        %v1209 = vpow.pop %v1208
        %v1210 = vmul.f32 %v1030, 1.442695
        %v1211 = vpow.pop %v1210
        %v1212 = vmul.f32 %v1031, 1.442695
        %v1213 = vpow.pop %v1212
        %v1214 = vmul.f32 %v1032, 1.442695
        %v1215 = vpow.pop %v1214
        %v1216 = vmul.f32 %v1033, 1.442695
        %v1217 = vpow.pop %v1216
        %v1218 = vmul.f32 %v1034, 1.442695
        %v1219 = vpow.pop %v1218
        %v1220 = vmul.f32 %v1035, 1.442695
        %v1221 = vpow.pop %v1220
        %v1222 = vmul.f32 %v1036, 1.442695
        %v1223 = vpow.pop %v1222
        %v1224 = vmul.f32 %v1037, 1.442695
        %v1225 = vpow.pop %v1224
        %v1226 = vmul.f32 %v1038, 1.442695
        %v1227 = vpow.pop %v1226
        %v1228 = vmul.f32 %v1039, 1.442695
        %v1229 = vpow.pop %v1228
        %v1230 = vmul.f32 %v1040, 1.442695
        %v1231 = vpow.pop %v1230
        %v1232 = vmul.f32 %v1041, 1.442695
        %v1233 = vpow.pop %v1232
        %v1234 = vmul.f32 %v1042, 1.442695
        %v1235 = vpow.pop %v1234
        %v1236 = vmul.f32 %v1043, 1.442695
        %v1237 = vpow.pop %v1236
        %v1238 = vmul.f32 %v1044, 1.442695
        %v1239 = vpow.pop %v1238
        %v1240 = vmul.f32 %v1045, 1.442695
        %v1241 = vpow.pop %v1240
        %v1242 = vmul.f32 %v1046, 1.442695
        %v1243 = vpow.pop %v1242
        %v1244 = vmul.f32 %v1047, 1.442695
        %v1245 = vpow.pop %v1244
        %v1246 = vmul.f32 %v1048, 1.442695
        %v1247 = vpow.pop %v1246
        %v1248 = vmul.f32 %v1049, 1.442695
        %v1249 = vpow.pop %v1248
        %v1250 = vmul.f32 %v1050, 1.442695
        %v1251 = vpow.pop %v1250
        %v1252 = vmul.f32 %v1051, 1.442695
        %v1253 = vpow.pop %v1252
        %v1254 = vmul.f32 %v1052, 1.442695
        %v1255 = vpow.pop %v1254
        %v1256 = vmul.f32 %v1053, 1.442695
        %v1257 = vpow.pop %v1256
        %v1258 = vmul.f32 %v1054, 1.442695
        %v1259 = vpow.pop %v1258
        %v1260 = vmul.f32 %v1055, 1.442695
        %v1261 = vpow.pop %v1260
        %v1262 = vmul.f32 %v1056, 1.442695
        %v1263 = vpow.pop %v1262
        %v1264 = vmul.f32 %v1057, 1.442695
        %v1265 = vpow.pop %v1264
        %v1266 = vmul.f32 %v1058, 1.442695
        %v1267 = vpow.pop %v1266
        %v1268 = vmul.f32 %v1059, 1.442695
        %v1269 = vpow.pop %v1268
        %v1270 = vmul.f32 %v1060, 1.442695
        %v1271 = vpow.pop %v1270
        %v1272 = vmul.f32 %v1061, 1.442695
        %v1273 = vpow.pop %v1272
        %v1274 = vmul.f32 %v1062, 1.442695
        %v1275 = vpow.pop %v1274
        %v1276 = vmul.f32 %v1063, 1.442695
        %v1277 = vpow.pop %v1276
        %v1278 = vmul.f32 %v1064, 1.442695
        %v1279 = vpow.pop %v1278
        %v1280 = vmul.f32 %v1065, 1.442695
        %v1281 = vpow.pop %v1280
        %v1282 = vmul.f32 %v1066, 1.442695
        %v1283 = vpow.pop %v1282
        %v1284 = vmul.f32 %v1067, 1.442695
        %v1285 = vpow.pop %v1284
        %v1286 = vmul.f32 %v1068, 1.442695
        %v1287 = vpow.pop %v1286
        %v1288 = vmul.f32 %v1069, 1.442695
        %v1289 = vpow.pop %v1288
        %v1290 = vmul.f32 %v1070, 1.442695
        %v1291 = vpow.pop %v1290
        %v1292 = vmul.f32 %v1071, 1.442695
        %v1293 = vpow.pop %v1292
        %v1294 = vmul.f32 %v1072, 1.442695
        %v1295 = vpow.pop %v1294
        %v1296 = vmul.f32 %v1073, 1.442695
        %v1297 = vpow.pop %v1296
        %v1298 = vmul.f32 %v1074, 1.442695
        %v1299 = vpow.pop %v1298
        %v1300 = vmul.f32 %v1075, 1.442695
        %v1301 = vpow.pop %v1300
        %v1302 = vmul.f32 %v1076, 1.442695
        %v1303 = vpow.pop %v1302
        %v1304 = vmul.f32 %v1077, 1.442695
        %v1305 = vpow.pop %v1304
        %v1306 = vmul.f32 %v1078, 1.442695
        %v1307 = vpow.pop %v1306
        %v1308 = vmul.f32 %v1079, 1.442695
        %v1309 = vpow.pop %v1308
        %v1310 = vmul.f32 %v1080, 1.442695
        %v1311 = vpow.pop %v1310
        %v1312 = vmul.f32 %v1081, 1.442695
        %v1313 = vpow.pop %v1312
        %v1314 = vmul.f32 %v1082, 1.442695
        %v1315 = vpow.pop %v1314
        %v1316 = vmul.f32 %v1083, 1.442695
        %v1317 = vpow.pop %v1316
        %v1318 = vmul.f32 %v1084, 1.442695
        %v1319 = vpow.pop %v1318
        %v1320 = vmul.f32 %v1085, 1.442695
        %v1321 = vpow.pop %v1320
        %v1322 = vmul.f32 %v1086, 1.442695
        %v1323 = vpow.pop %v1322
        %v1324 = vmul.f32 %v1087, 1.442695
        %v1325 = vpow.pop %v1324
        %v1326 = vmul.f32 %v1088, 1.442695
        %v1327 = vpow.pop %v1326
        %v1328 = vmul.f32 %v1089, 1.442695
        %v1329 = vpow.pop %v1328
        %v1330 = vmul.f32 %v1090, 1.442695
        %v1331 = vpow.pop %v1330
        %v1332 = vmul.f32 %v1091, 1.442695
        %v1333 = vpow.pop %v1332
        %v1334 = vmul.f32 %v1092, 1.442695
        %v1335 = vpow.pop %v1334
        %v1336 = vmul.f32 %v1093, 1.442695
        %v1337 = vpow.pop %v1336
        %v1338 = vmul.f32 %v1094, 1.442695
        %v1339 = vpow.pop %v1338
        %v1340 = vmul.f32 %v1095, 1.442695
        %v1341 = vpow.pop %v1340
        %v1342 = vmul.f32 %v1096, 1.442695
        %v1343 = vpow.pop %v1342
        %v1344 = vmul.f32 %v1097, 1.442695
        %v1345 = vpow.pop %v1344
        %v1346 = vmul.f32 %v1098, 1.442695
        %v1347 = vpow.pop %v1346
        %v1348 = vmul.f32 %v1099, 1.442695
        %v1349 = vpow.pop %v1348
        %v1350 = vmul.f32 %v1100, 1.442695
        %v1351 = vpow.pop %v1350
        %v1352 = vmul.f32 %v1101, 1.442695
        %v1353 = vpow.pop %v1352
        %v1354 = vmul.f32 %v1102, 1.442695
        %v1355 = vpow.pop %v1354
        %v1356 = vmul.f32 %v1103, 1.442695
        %v1357 = vpow.pop %v1356
        %v1358 = vmul.f32 %v1104, 1.442695
        %v1359 = vpow.pop %v1358
        %v1360 = vmul.f32 %v1105, 1.442695
        %v1361 = vpow.pop %v1360
        %v1362 = vadd.f32 %v1107, 1.0
        %v1363 = vadd.f32 %v1109, 1.0
        %v1364 = vadd.f32 %v1111, 1.0
        %v1365 = vadd.f32 %v1113, 1.0
        %v1366 = vadd.f32 %v1115, 1.0
        %v1367 = vadd.f32 %v1117, 1.0
        %v1368 = vadd.f32 %v1119, 1.0
        %v1369 = vadd.f32 %v1121, 1.0
        %v1370 = vadd.f32 %v1123, 1.0
        %v1371 = vadd.f32 %v1125, 1.0
        %v1372 = vadd.f32 %v1127, 1.0
        %v1373 = vadd.f32 %v1129, 1.0
        %v1374 = vadd.f32 %v1131, 1.0
        %v1375 = vadd.f32 %v1133, 1.0
        %v1376 = vadd.f32 %v1135, 1.0
        %v1377 = vadd.f32 %v1137, 1.0
        %v1378 = vadd.f32 %v1139, 1.0
        %v1379 = vadd.f32 %v1141, 1.0
        %v1380 = vadd.f32 %v1143, 1.0
        %v1381 = vadd.f32 %v1145, 1.0
        %v1382 = vadd.f32 %v1147, 1.0
        %v1383 = vadd.f32 %v1149, 1.0
        %v1384 = vadd.f32 %v1151, 1.0
        %v1385 = vadd.f32 %v1153, 1.0
        %v1386 = vadd.f32 %v1155, 1.0
        %v1387 = vadd.f32 %v1157, 1.0
        %v1388 = vadd.f32 %v1159, 1.0
        %v1389 = vadd.f32 %v1161, 1.0
        %v1390 = vadd.f32 %v1163, 1.0
        %v1391 = vadd.f32 %v1165, 1.0
        %v1392 = vadd.f32 %v1167, 1.0
        %v1393 = vadd.f32 %v1169, 1.0
        %v1394 = vadd.f32 %v1171, 1.0
        %v1395 = vadd.f32 %v1173, 1.0
        %v1396 = vadd.f32 %v1175, 1.0
        %v1397 = vadd.f32 %v1177, 1.0
        %v1398 = vadd.f32 %v1179, 1.0
        %v1399 = vadd.f32 %v1181, 1.0
        %v1400 = vadd.f32 %v1183, 1.0
        %v1401 = vadd.f32 %v1185, 1.0
        %v1402 = vadd.f32 %v1187, 1.0
        %v1403 = vadd.f32 %v1189, 1.0
        %v1404 = vadd.f32 %v1191, 1.0
        %v1405 = vadd.f32 %v1193, 1.0
        %v1406 = vadd.f32 %v1195, 1.0
        %v1407 = vadd.f32 %v1197, 1.0
        %v1408 = vadd.f32 %v1199, 1.0
        %v1409 = vadd.f32 %v1201, 1.0
        %v1410 = vadd.f32 %v1203, 1.0
        %v1411 = vadd.f32 %v1205, 1.0
        %v1412 = vadd.f32 %v1207, 1.0
        %v1413 = vadd.f32 %v1209, 1.0
        %v1414 = vadd.f32 %v1211, 1.0
        %v1415 = vadd.f32 %v1213, 1.0
        %v1416 = vadd.f32 %v1215, 1.0
        %v1417 = vadd.f32 %v1217, 1.0
        %v1418 = vadd.f32 %v1219, 1.0
        %v1419 = vadd.f32 %v1221, 1.0
        %v1420 = vadd.f32 %v1223, 1.0
        %v1421 = vadd.f32 %v1225, 1.0
        %v1422 = vadd.f32 %v1227, 1.0
        %v1423 = vadd.f32 %v1229, 1.0
        %v1424 = vadd.f32 %v1231, 1.0
        %v1425 = vadd.f32 %v1233, 1.0
        %v1426 = vadd.f32 %v1235, 1.0
        %v1427 = vadd.f32 %v1237, 1.0
        %v1428 = vadd.f32 %v1239, 1.0
        %v1429 = vadd.f32 %v1241, 1.0
        %v1430 = vadd.f32 %v1243, 1.0
        %v1431 = vadd.f32 %v1245, 1.0
        %v1432 = vadd.f32 %v1247, 1.0
        %v1433 = vadd.f32 %v1249, 1.0
        %v1434 = vadd.f32 %v1251, 1.0
        %v1435 = vadd.f32 %v1253, 1.0
        %v1436 = vadd.f32 %v1255, 1.0
        %v1437 = vadd.f32 %v1257, 1.0
        %v1438 = vadd.f32 %v1259, 1.0
        %v1439 = vadd.f32 %v1261, 1.0
        %v1440 = vadd.f32 %v1263, 1.0
        %v1441 = vadd.f32 %v1265, 1.0
        %v1442 = vadd.f32 %v1267, 1.0
        %v1443 = vadd.f32 %v1269, 1.0
        %v1444 = vadd.f32 %v1271, 1.0
        %v1445 = vadd.f32 %v1273, 1.0
        %v1446 = vadd.f32 %v1275, 1.0
        %v1447 = vadd.f32 %v1277, 1.0
        %v1448 = vadd.f32 %v1279, 1.0
        %v1449 = vadd.f32 %v1281, 1.0
        %v1450 = vadd.f32 %v1283, 1.0
        %v1451 = vadd.f32 %v1285, 1.0
        %v1452 = vadd.f32 %v1287, 1.0
        %v1453 = vadd.f32 %v1289, 1.0
        %v1454 = vadd.f32 %v1291, 1.0
        %v1455 = vadd.f32 %v1293, 1.0
        %v1456 = vadd.f32 %v1295, 1.0
        %v1457 = vadd.f32 %v1297, 1.0
        %v1458 = vadd.f32 %v1299, 1.0
        %v1459 = vadd.f32 %v1301, 1.0
        %v1460 = vadd.f32 %v1303, 1.0
        %v1461 = vadd.f32 %v1305, 1.0
        %v1462 = vadd.f32 %v1307, 1.0
        %v1463 = vadd.f32 %v1309, 1.0
        %v1464 = vadd.f32 %v1311, 1.0
        %v1465 = vadd.f32 %v1313, 1.0
        %v1466 = vadd.f32 %v1315, 1.0
        %v1467 = vadd.f32 %v1317, 1.0
        %v1468 = vadd.f32 %v1319, 1.0
        %v1469 = vadd.f32 %v1321, 1.0
        %v1470 = vadd.f32 %v1323, 1.0
        %v1471 = vadd.f32 %v1325, 1.0
        %v1472 = vadd.f32 %v1327, 1.0
        %v1473 = vadd.f32 %v1329, 1.0
        %v1474 = vadd.f32 %v1331, 1.0
        %v1475 = vadd.f32 %v1333, 1.0
        %v1476 = vadd.f32 %v1335, 1.0
        %v1477 = vadd.f32 %v1337, 1.0
        %v1478 = vadd.f32 %v1339, 1.0
        %v1479 = vadd.f32 %v1341, 1.0
        %v1480 = vadd.f32 %v1343, 1.0
        %v1481 = vadd.f32 %v1345, 1.0
        %v1482 = vadd.f32 %v1347, 1.0
        %v1483 = vadd.f32 %v1349, 1.0
        %v1484 = vadd.f32 %v1351, 1.0
        %v1485 = vadd.f32 %v1353, 1.0
        %v1486 = vadd.f32 %v1355, 1.0
        %v1487 = vadd.f32 %v1357, 1.0
        %v1488 = vadd.f32 %v1359, 1.0
        %v1489 = vadd.f32 %v1361, 1.0
        %v1490 = vrcp.pop %v1362
        %v1491 = vmul.f32 1.0, %v1490
        %v1492 = vrcp.pop %v1363
        %v1493 = vmul.f32 1.0, %v1492
        %v1494 = vrcp.pop %v1364
        %v1495 = vmul.f32 1.0, %v1494
        %v1496 = vrcp.pop %v1365
        %v1497 = vmul.f32 1.0, %v1496
        %v1498 = vrcp.pop %v1366
        %v1499 = vmul.f32 1.0, %v1498
        %v1500 = vrcp.pop %v1367
        %v1501 = vmul.f32 1.0, %v1500
        %v1502 = vrcp.pop %v1368
        %v1503 = vmul.f32 1.0, %v1502
        %v1504 = vrcp.pop %v1369
        %v1505 = vmul.f32 1.0, %v1504
        %v1506 = vrcp.pop %v1370
        %v1507 = vmul.f32 1.0, %v1506
        %v1508 = vrcp.pop %v1371
        %v1509 = vmul.f32 1.0, %v1508
        %v1510 = vrcp.pop %v1372
        %v1511 = vmul.f32 1.0, %v1510
        %v1512 = vrcp.pop %v1373
        %v1513 = vmul.f32 1.0, %v1512
        %v1514 = vrcp.pop %v1374
        %v1515 = vmul.f32 1.0, %v1514
        %v1516 = vrcp.pop %v1375
        %v1517 = vmul.f32 1.0, %v1516
        %v1518 = vrcp.pop %v1376
        %v1519 = vmul.f32 1.0, %v1518
        %v1520 = vrcp.pop %v1377
        %v1521 = vmul.f32 1.0, %v1520
        %v1522 = vrcp.pop %v1378
        %v1523 = vmul.f32 1.0, %v1522
        %v1524 = vrcp.pop %v1379
        %v1525 = vmul.f32 1.0, %v1524
        %v1526 = vrcp.pop %v1380
        %v1527 = vmul.f32 1.0, %v1526
        %v1528 = vrcp.pop %v1381
        %v1529 = vmul.f32 1.0, %v1528
        %v1530 = vrcp.pop %v1382
        %v1531 = vmul.f32 1.0, %v1530
        %v1532 = vrcp.pop %v1383
        %v1533 = vmul.f32 1.0, %v1532
        %v1534 = vrcp.pop %v1384
        %v1535 = vmul.f32 1.0, %v1534
        %v1536 = vrcp.pop %v1385
        %v1537 = vmul.f32 1.0, %v1536
        %v1538 = vrcp.pop %v1386
        %v1539 = vmul.f32 1.0, %v1538
        %v1540 = vrcp.pop %v1387
        %v1541 = vmul.f32 1.0, %v1540
        %v1542 = vrcp.pop %v1388
        %v1543 = vmul.f32 1.0, %v1542
        %v1544 = vrcp.pop %v1389
        %v1545 = vmul.f32 1.0, %v1544
        %v1546 = vrcp.pop %v1390
        %v1547 = vmul.f32 1.0, %v1546
        %v1548 = vrcp.pop %v1391
        %v1549 = vmul.f32 1.0, %v1548
        %v1550 = vrcp.pop %v1392
        %v1551 = vmul.f32 1.0, %v1550
        %v1552 = vrcp.pop %v1393
        %v1553 = vmul.f32 1.0, %v1552
        %v1554 = vrcp.pop %v1394
        %v1555 = vmul.f32 1.0, %v1554
        %v1556 = vrcp.pop %v1395
        %v1557 = vmul.f32 1.0, %v1556
        %v1558 = vrcp.pop %v1396
        %v1559 = vmul.f32 1.0, %v1558
        %v1560 = vrcp.pop %v1397
        %v1561 = vmul.f32 1.0, %v1560
        %v1562 = vrcp.pop %v1398
        %v1563 = vmul.f32 1.0, %v1562
        %v1564 = vrcp.pop %v1399
        %v1565 = vmul.f32 1.0, %v1564
        %v1566 = vrcp.pop %v1400
        %v1567 = vmul.f32 1.0, %v1566
        %v1568 = vrcp.pop %v1401
        %v1569 = vmul.f32 1.0, %v1568
        %v1570 = vrcp.pop %v1402
        %v1571 = vmul.f32 1.0, %v1570
        %v1572 = vrcp.pop %v1403
        %v1573 = vmul.f32 1.0, %v1572
        %v1574 = vrcp.pop %v1404
        %v1575 = vmul.f32 1.0, %v1574
        %v1576 = vrcp.pop %v1405
        %v1577 = vmul.f32 1.0, %v1576
        %v1578 = vrcp.pop %v1406
        %v1579 = vmul.f32 1.0, %v1578
        %v1580 = vrcp.pop %v1407
        %v1581 = vmul.f32 1.0, %v1580
        %v1582 = vrcp.pop %v1408
        %v1583 = vmul.f32 1.0, %v1582
        %v1584 = vrcp.pop %v1409
        %v1585 = vmul.f32 1.0, %v1584
        %v1586 = vrcp.pop %v1410
        %v1587 = vmul.f32 1.0, %v1586
        %v1588 = vrcp.pop %v1411
        %v1589 = vmul.f32 1.0, %v1588
        %v1590 = vrcp.pop %v1412
        %v1591 = vmul.f32 1.0, %v1590
        %v1592 = vrcp.pop %v1413
        %v1593 = vmul.f32 1.0, %v1592
        %v1594 = vrcp.pop %v1414
        %v1595 = vmul.f32 1.0, %v1594
        %v1596 = vrcp.pop %v1415
        %v1597 = vmul.f32 1.0, %v1596
        %v1598 = vrcp.pop %v1416
        %v1599 = vmul.f32 1.0, %v1598
        %v1600 = vrcp.pop %v1417
        %v1601 = vmul.f32 1.0, %v1600
        %v1602 = vrcp.pop %v1418
        %v1603 = vmul.f32 1.0, %v1602
        %v1604 = vrcp.pop %v1419
        %v1605 = vmul.f32 1.0, %v1604
        %v1606 = vrcp.pop %v1420
        %v1607 = vmul.f32 1.0, %v1606
        %v1608 = vrcp.pop %v1421
        %v1609 = vmul.f32 1.0, %v1608
        %v1610 = vrcp.pop %v1422
        %v1611 = vmul.f32 1.0, %v1610
        %v1612 = vrcp.pop %v1423
        %v1613 = vmul.f32 1.0, %v1612
        %v1614 = vrcp.pop %v1424
        %v1615 = vmul.f32 1.0, %v1614
        %v1616 = vrcp.pop %v1425
        %v1617 = vmul.f32 1.0, %v1616
        %v1618 = vrcp.pop %v1426
        %v1619 = vmul.f32 1.0, %v1618
        %v1620 = vrcp.pop %v1427
        %v1621 = vmul.f32 1.0, %v1620
        %v1622 = vrcp.pop %v1428
        %v1623 = vmul.f32 1.0, %v1622
        %v1624 = vrcp.pop %v1429
        %v1625 = vmul.f32 1.0, %v1624
        %v1626 = vrcp.pop %v1430
        %v1627 = vmul.f32 1.0, %v1626
        %v1628 = vrcp.pop %v1431
        %v1629 = vmul.f32 1.0, %v1628
        %v1630 = vrcp.pop %v1432
        %v1631 = vmul.f32 1.0, %v1630
        %v1632 = vrcp.pop %v1433
        %v1633 = vmul.f32 1.0, %v1632
        %v1634 = vrcp.pop %v1434
        %v1635 = vmul.f32 1.0, %v1634
        %v1636 = vrcp.pop %v1435
        %v1637 = vmul.f32 1.0, %v1636
        %v1638 = vrcp.pop %v1436
        %v1639 = vmul.f32 1.0, %v1638
        %v1640 = vrcp.pop %v1437
        %v1641 = vmul.f32 1.0, %v1640
        %v1642 = vrcp.pop %v1438
        %v1643 = vmul.f32 1.0, %v1642
        %v1644 = vrcp.pop %v1439
        %v1645 = vmul.f32 1.0, %v1644
        %v1646 = vrcp.pop %v1440
        %v1647 = vmul.f32 1.0, %v1646
        %v1648 = vrcp.pop %v1441
        %v1649 = vmul.f32 1.0, %v1648
        %v1650 = vrcp.pop %v1442
        %v1651 = vmul.f32 1.0, %v1650
        %v1652 = vrcp.pop %v1443
        %v1653 = vmul.f32 1.0, %v1652
        %v1654 = vrcp.pop %v1444
        %v1655 = vmul.f32 1.0, %v1654
        %v1656 = vrcp.pop %v1445
        %v1657 = vmul.f32 1.0, %v1656
        %v1658 = vrcp.pop %v1446
        %v1659 = vmul.f32 1.0, %v1658
        %v1660 = vrcp.pop %v1447
        %v1661 = vmul.f32 1.0, %v1660
        %v1662 = vrcp.pop %v1448
        %v1663 = vmul.f32 1.0, %v1662
        %v1664 = vrcp.pop %v1449
        %v1665 = vmul.f32 1.0, %v1664
        %v1666 = vrcp.pop %v1450
        %v1667 = vmul.f32 1.0, %v1666
        %v1668 = vrcp.pop %v1451
        %v1669 = vmul.f32 1.0, %v1668
        %v1670 = vrcp.pop %v1452
        %v1671 = vmul.f32 1.0, %v1670
        %v1672 = vrcp.pop %v1453
        %v1673 = vmul.f32 1.0, %v1672
        %v1674 = vrcp.pop %v1454
        %v1675 = vmul.f32 1.0, %v1674
        %v1676 = vrcp.pop %v1455
        %v1677 = vmul.f32 1.0, %v1676
        %v1678 = vrcp.pop %v1456
        %v1679 = vmul.f32 1.0, %v1678
        %v1680 = vrcp.pop %v1457
        %v1681 = vmul.f32 1.0, %v1680
        %v1682 = vrcp.pop %v1458
        %v1683 = vmul.f32 1.0, %v1682
        %v1684 = vrcp.pop %v1459
        %v1685 = vmul.f32 1.0, %v1684
        %v1686 = vrcp.pop %v1460
        %v1687 = vmul.f32 1.0, %v1686
        %v1688 = vrcp.pop %v1461
        %v1689 = vmul.f32 1.0, %v1688
        %v1690 = vrcp.pop %v1462
        %v1691 = vmul.f32 1.0, %v1690
        %v1692 = vrcp.pop %v1463
        %v1693 = vmul.f32 1.0, %v1692
        %v1694 = vrcp.pop %v1464
        %v1695 = vmul.f32 1.0, %v1694
        %v1696 = vrcp.pop %v1465
        %v1697 = vmul.f32 1.0, %v1696
        %v1698 = vrcp.pop %v1466
        %v1699 = vmul.f32 1.0, %v1698
        %v1700 = vrcp.pop %v1467
        %v1701 = vmul.f32 1.0, %v1700
        %v1702 = vrcp.pop %v1468
        %v1703 = vmul.f32 1.0, %v1702
        %v1704 = vrcp.pop %v1469
        %v1705 = vmul.f32 1.0, %v1704
        %v1706 = vrcp.pop %v1470
        %v1707 = vmul.f32 1.0, %v1706
        %v1708 = vrcp.pop %v1471
        %v1709 = vmul.f32 1.0, %v1708
        %v1710 = vrcp.pop %v1472
        %v1711 = vmul.f32 1.0, %v1710
        %v1712 = vrcp.pop %v1473
        %v1713 = vmul.f32 1.0, %v1712
        %v1714 = vrcp.pop %v1474
        %v1715 = vmul.f32 1.0, %v1714
        %v1716 = vrcp.pop %v1475
        %v1717 = vmul.f32 1.0, %v1716
        %v1718 = vrcp.pop %v1476
        %v1719 = vmul.f32 1.0, %v1718
        %v1720 = vrcp.pop %v1477
        %v1721 = vmul.f32 1.0, %v1720
        %v1722 = vrcp.pop %v1478
        %v1723 = vmul.f32 1.0, %v1722
        %v1724 = vrcp.pop %v1479
        %v1725 = vmul.f32 1.0, %v1724
        %v1726 = vrcp.pop %v1480
        %v1727 = vmul.f32 1.0, %v1726
        %v1728 = vrcp.pop %v1481
        %v1729 = vmul.f32 1.0, %v1728
        %v1730 = vrcp.pop %v1482
        %v1731 = vmul.f32 1.0, %v1730
        %v1732 = vrcp.pop %v1483
        %v1733 = vmul.f32 1.0, %v1732
        %v1734 = vrcp.pop %v1484
        %v1735 = vmul.f32 1.0, %v1734
        %v1736 = vrcp.pop %v1485
        %v1737 = vmul.f32 1.0, %v1736
        %v1738 = vrcp.pop %v1486
        %v1739 = vmul.f32 1.0, %v1738
        %v1740 = vrcp.pop %v1487
        %v1741 = vmul.f32 1.0, %v1740
        %v1742 = vrcp.pop %v1488
        %v1743 = vmul.f32 1.0, %v1742
        %v1744 = vrcp.pop %v1489
        %v1745 = vmul.f32 1.0, %v1744
        %v1874 = vlaneseq
        %v1875 = vand.u32 %v1874, 127
        %v1876 = vlaneseq
        %v1877 = vshrl.u32 %v1876, 7
        %v1878 = vsub.s32 %v1875, %v1877
        %v1879 = vrot.slane %v1491, %v1878
        %v1880 = vadd.s32 %v1875, 4294967288
        %v1881 = vlaneseq
        %v1882 = vshrl.u32 %v1881, 7
        %v1883 = vsub.s32 %v1880, %v1882
        %v1884 = vrot.slane %v1493, %v1883
        %vm1885 = vcmask 130112
        %v1886 = vsel %vm1885, %v1884, %v1879
        %v1887 = vadd.s32 %v1875, 4294967280
        %v1888 = vlaneseq
        %v1889 = vshrl.u32 %v1888, 7
        %v1890 = vsub.s32 %v1887, %v1889
        %v1891 = vrot.slane %v1495, %v1890
        %vm1892 = vcmask 195712
        %v1893 = vsel %vm1892, %v1891, %v1886
        %v1894 = vadd.s32 %v1875, 4294967272
        %v1895 = vlaneseq
        %v1896 = vshrl.u32 %v1895, 7
        %v1897 = vsub.s32 %v1894, %v1896
        %v1898 = vrot.slane %v1497, %v1897
        %vm1899 = vcmask 261312
        %v1900 = vsel %vm1899, %v1898, %v1893
        %v1901 = vadd.s32 %v1875, 4294967264
        %v1902 = vlaneseq
        %v1903 = vshrl.u32 %v1902, 7
        %v1904 = vsub.s32 %v1901, %v1903
        %v1905 = vrot.slane %v1499, %v1904
        %vm1906 = vcmask 326912
        %v1907 = vsel %vm1906, %v1905, %v1900
        %v1908 = vadd.s32 %v1875, 4294967256
        %v1909 = vlaneseq
        %v1910 = vshrl.u32 %v1909, 7
        %v1911 = vsub.s32 %v1908, %v1910
        %v1912 = vrot.slane %v1501, %v1911
        %vm1913 = vcmask 392512
        %v1914 = vsel %vm1913, %v1912, %v1907
        %v1915 = vadd.s32 %v1875, 4294967248
        %v1916 = vlaneseq
        %v1917 = vshrl.u32 %v1916, 7
        %v1918 = vsub.s32 %v1915, %v1917
        %v1919 = vrot.slane %v1503, %v1918
        %vm1920 = vcmask 458112
        %v1921 = vsel %vm1920, %v1919, %v1914
        %v1922 = vadd.s32 %v1875, 4294967240
        %v1923 = vlaneseq
        %v1924 = vshrl.u32 %v1923, 7
        %v1925 = vsub.s32 %v1922, %v1924
        %v1926 = vrot.slane %v1505, %v1925
        %vm1927 = vcmask 523712
        %v1928 = vsel %vm1927, %v1926, %v1921
        %v1929 = vadd.s32 %v1875, 4294967232
        %v1930 = vlaneseq
        %v1931 = vshrl.u32 %v1930, 7
        %v1932 = vsub.s32 %v1929, %v1931
        %v1933 = vrot.slane %v1507, %v1932
        %vm1934 = vcmask 589312
        %v1935 = vsel %vm1934, %v1933, %v1928
        %v1936 = vadd.s32 %v1875, 4294967224
        %v1937 = vlaneseq
        %v1938 = vshrl.u32 %v1937, 7
        %v1939 = vsub.s32 %v1936, %v1938
        %v1940 = vrot.slane %v1509, %v1939
        %vm1941 = vcmask 654912
        %v1942 = vsel %vm1941, %v1940, %v1935
        %v1943 = vadd.s32 %v1875, 4294967216
        %v1944 = vlaneseq
        %v1945 = vshrl.u32 %v1944, 7
        %v1946 = vsub.s32 %v1943, %v1945
        %v1947 = vrot.slane %v1511, %v1946
        %vm1948 = vcmask 720512
        %v1949 = vsel %vm1948, %v1947, %v1942
        %v1950 = vadd.s32 %v1875, 4294967208
        %v1951 = vlaneseq
        %v1952 = vshrl.u32 %v1951, 7
        %v1953 = vsub.s32 %v1950, %v1952
        %v1954 = vrot.slane %v1513, %v1953
        %vm1955 = vcmask 786112
        %v1956 = vsel %vm1955, %v1954, %v1949
        %v1957 = vadd.s32 %v1875, 4294967200
        %v1958 = vlaneseq
        %v1959 = vshrl.u32 %v1958, 7
        %v1960 = vsub.s32 %v1957, %v1959
        %v1961 = vrot.slane %v1515, %v1960
        %vm1962 = vcmask 851712
        %v1963 = vsel %vm1962, %v1961, %v1956
        %v1964 = vadd.s32 %v1875, 4294967192
        %v1965 = vlaneseq
        %v1966 = vshrl.u32 %v1965, 7
        %v1967 = vsub.s32 %v1964, %v1966
        %v1968 = vrot.slane %v1517, %v1967
        %vm1969 = vcmask 917312
        %v1970 = vsel %vm1969, %v1968, %v1963
        %v1971 = vadd.s32 %v1875, 4294967184
        %v1972 = vlaneseq
        %v1973 = vshrl.u32 %v1972, 7
        %v1974 = vsub.s32 %v1971, %v1973
        %v1975 = vrot.slane %v1519, %v1974
        %vm1976 = vcmask 982912
        %v1977 = vsel %vm1976, %v1975, %v1970
        %v1978 = vadd.s32 %v1875, 4294967176
        %v1979 = vlaneseq
        %v1980 = vshrl.u32 %v1979, 7
        %v1981 = vsub.s32 %v1978, %v1980
        %v1982 = vrot.slane %v1521, %v1981
        %vm1983 = vcmask 1048512
        %v1984 = vsel %vm1983, %v1982, %v1977
        %v1985 = vlaneseq
        %v1986 = vshrl.u32 %v1985, 7
        %v1987 = vsub.s32 %v1875, %v1986
        %v1988 = vrot.slane %v1523, %v1987
        %v1989 = vlaneseq
        %v1990 = vshrl.u32 %v1989, 7
        %v1991 = vsub.s32 %v1880, %v1990
        %v1992 = vrot.slane %v1525, %v1991
        %v1993 = vsel %vm1885, %v1992, %v1988
        %v1994 = vlaneseq
        %v1995 = vshrl.u32 %v1994, 7
        %v1996 = vsub.s32 %v1887, %v1995
        %v1997 = vrot.slane %v1527, %v1996
        %v1998 = vsel %vm1892, %v1997, %v1993
        %v1999 = vlaneseq
        %v2000 = vshrl.u32 %v1999, 7
        %v2001 = vsub.s32 %v1894, %v2000
        %v2002 = vrot.slane %v1529, %v2001
        %v2003 = vsel %vm1899, %v2002, %v1998
        %v2004 = vlaneseq
        %v2005 = vshrl.u32 %v2004, 7
        %v2006 = vsub.s32 %v1901, %v2005
        %v2007 = vrot.slane %v1531, %v2006
        %v2008 = vsel %vm1906, %v2007, %v2003
        %v2009 = vlaneseq
        %v2010 = vshrl.u32 %v2009, 7
        %v2011 = vsub.s32 %v1908, %v2010
        %v2012 = vrot.slane %v1533, %v2011
        %v2013 = vsel %vm1913, %v2012, %v2008
        %v2014 = vlaneseq
        %v2015 = vshrl.u32 %v2014, 7
        %v2016 = vsub.s32 %v1915, %v2015
        %v2017 = vrot.slane %v1535, %v2016
        %v2018 = vsel %vm1920, %v2017, %v2013
        %v2019 = vlaneseq
        %v2020 = vshrl.u32 %v2019, 7
        %v2021 = vsub.s32 %v1922, %v2020
        %v2022 = vrot.slane %v1537, %v2021
        %v2023 = vsel %vm1927, %v2022, %v2018
        %v2024 = vlaneseq
        %v2025 = vshrl.u32 %v2024, 7
        %v2026 = vsub.s32 %v1929, %v2025
        %v2027 = vrot.slane %v1539, %v2026
        %v2028 = vsel %vm1934, %v2027, %v2023
        %v2029 = vlaneseq
        %v2030 = vshrl.u32 %v2029, 7
        %v2031 = vsub.s32 %v1936, %v2030
        %v2032 = vrot.slane %v1541, %v2031
        %v2033 = vsel %vm1941, %v2032, %v2028
        %v2034 = vlaneseq
        %v2035 = vshrl.u32 %v2034, 7
        %v2036 = vsub.s32 %v1943, %v2035
        %v2037 = vrot.slane %v1543, %v2036
        %v2038 = vsel %vm1948, %v2037, %v2033
        %v2039 = vlaneseq
        %v2040 = vshrl.u32 %v2039, 7
        %v2041 = vsub.s32 %v1950, %v2040
        %v2042 = vrot.slane %v1545, %v2041
        %v2043 = vsel %vm1955, %v2042, %v2038
        %v2044 = vlaneseq
        %v2045 = vshrl.u32 %v2044, 7
        %v2046 = vsub.s32 %v1957, %v2045
        %v2047 = vrot.slane %v1547, %v2046
        %v2048 = vsel %vm1962, %v2047, %v2043
        %v2049 = vlaneseq
        %v2050 = vshrl.u32 %v2049, 7
        %v2051 = vsub.s32 %v1964, %v2050
        %v2052 = vrot.slane %v1549, %v2051
        %v2053 = vsel %vm1969, %v2052, %v2048
        %v2054 = vlaneseq
        %v2055 = vshrl.u32 %v2054, 7
        %v2056 = vsub.s32 %v1971, %v2055
        %v2057 = vrot.slane %v1551, %v2056
        %v2058 = vsel %vm1976, %v2057, %v2053
        %v2059 = vlaneseq
        %v2060 = vshrl.u32 %v2059, 7
        %v2061 = vsub.s32 %v1978, %v2060
        %v2062 = vrot.slane %v1553, %v2061
        %v2063 = vsel %vm1983, %v2062, %v2058
        %v2064 = vlaneseq
        %v2065 = vshrl.u32 %v2064, 7
        %v2066 = vsub.s32 %v1875, %v2065
        %v2067 = vrot.slane %v1555, %v2066
        %v2068 = vlaneseq
        %v2069 = vshrl.u32 %v2068, 7
        %v2070 = vsub.s32 %v1880, %v2069
        %v2071 = vrot.slane %v1557, %v2070
        %v2072 = vsel %vm1885, %v2071, %v2067
        %v2073 = vlaneseq
        %v2074 = vshrl.u32 %v2073, 7
        %v2075 = vsub.s32 %v1887, %v2074
        %v2076 = vrot.slane %v1559, %v2075
        %v2077 = vsel %vm1892, %v2076, %v2072
        %v2078 = vlaneseq
        %v2079 = vshrl.u32 %v2078, 7
        %v2080 = vsub.s32 %v1894, %v2079
        %v2081 = vrot.slane %v1561, %v2080
        %v2082 = vsel %vm1899, %v2081, %v2077
        %v2083 = vlaneseq
        %v2084 = vshrl.u32 %v2083, 7
        %v2085 = vsub.s32 %v1901, %v2084
        %v2086 = vrot.slane %v1563, %v2085
        %v2087 = vsel %vm1906, %v2086, %v2082
        %v2088 = vlaneseq
        %v2089 = vshrl.u32 %v2088, 7
        %v2090 = vsub.s32 %v1908, %v2089
        %v2091 = vrot.slane %v1565, %v2090
        %v2092 = vsel %vm1913, %v2091, %v2087
        %v2093 = vlaneseq
        %v2094 = vshrl.u32 %v2093, 7
        %v2095 = vsub.s32 %v1915, %v2094
        %v2096 = vrot.slane %v1567, %v2095
        %v2097 = vsel %vm1920, %v2096, %v2092
        %v2098 = vlaneseq
        %v2099 = vshrl.u32 %v2098, 7
        %v2100 = vsub.s32 %v1922, %v2099
        %v2101 = vrot.slane %v1569, %v2100
        %v2102 = vsel %vm1927, %v2101, %v2097
        %v2103 = vlaneseq
        %v2104 = vshrl.u32 %v2103, 7
        %v2105 = vsub.s32 %v1929, %v2104
        %v2106 = vrot.slane %v1571, %v2105
        %v2107 = vsel %vm1934, %v2106, %v2102
        %v2108 = vlaneseq
        %v2109 = vshrl.u32 %v2108, 7
        %v2110 = vsub.s32 %v1936, %v2109
        %v2111 = vrot.slane %v1573, %v2110
        %v2112 = vsel %vm1941, %v2111, %v2107
        %v2113 = vlaneseq
        %v2114 = vshrl.u32 %v2113, 7
        %v2115 = vsub.s32 %v1943, %v2114
        %v2116 = vrot.slane %v1575, %v2115
        %v2117 = vsel %vm1948, %v2116, %v2112
        %v2118 = vlaneseq
        %v2119 = vshrl.u32 %v2118, 7
        %v2120 = vsub.s32 %v1950, %v2119
        %v2121 = vrot.slane %v1577, %v2120
        %v2122 = vsel %vm1955, %v2121, %v2117
        %v2123 = vlaneseq
        %v2124 = vshrl.u32 %v2123, 7
        %v2125 = vsub.s32 %v1957, %v2124
        %v2126 = vrot.slane %v1579, %v2125
        %v2127 = vsel %vm1962, %v2126, %v2122
        %v2128 = vlaneseq
        %v2129 = vshrl.u32 %v2128, 7
        %v2130 = vsub.s32 %v1964, %v2129
        %v2131 = vrot.slane %v1581, %v2130
        %v2132 = vsel %vm1969, %v2131, %v2127
        %v2133 = vlaneseq
        %v2134 = vshrl.u32 %v2133, 7
        %v2135 = vsub.s32 %v1971, %v2134
        %v2136 = vrot.slane %v1583, %v2135
        %v2137 = vsel %vm1976, %v2136, %v2132
        %v2138 = vlaneseq
        %v2139 = vshrl.u32 %v2138, 7
        %v2140 = vsub.s32 %v1978, %v2139
        %v2141 = vrot.slane %v1585, %v2140
        %v2142 = vsel %vm1983, %v2141, %v2137
        %v2143 = vlaneseq
        %v2144 = vshrl.u32 %v2143, 7
        %v2145 = vsub.s32 %v1875, %v2144
        %v2146 = vrot.slane %v1587, %v2145
        %v2147 = vlaneseq
        %v2148 = vshrl.u32 %v2147, 7
        %v2149 = vsub.s32 %v1880, %v2148
        %v2150 = vrot.slane %v1589, %v2149
        %v2151 = vsel %vm1885, %v2150, %v2146
        %v2152 = vlaneseq
        %v2153 = vshrl.u32 %v2152, 7
        %v2154 = vsub.s32 %v1887, %v2153
        %v2155 = vrot.slane %v1591, %v2154
        %v2156 = vsel %vm1892, %v2155, %v2151
        %v2157 = vlaneseq
        %v2158 = vshrl.u32 %v2157, 7
        %v2159 = vsub.s32 %v1894, %v2158
        %v2160 = vrot.slane %v1593, %v2159
        %v2161 = vsel %vm1899, %v2160, %v2156
        %v2162 = vlaneseq
        %v2163 = vshrl.u32 %v2162, 7
        %v2164 = vsub.s32 %v1901, %v2163
        %v2165 = vrot.slane %v1595, %v2164
        %v2166 = vsel %vm1906, %v2165, %v2161
        %v2167 = vlaneseq
        %v2168 = vshrl.u32 %v2167, 7
        %v2169 = vsub.s32 %v1908, %v2168
        %v2170 = vrot.slane %v1597, %v2169
        %v2171 = vsel %vm1913, %v2170, %v2166
        %v2172 = vlaneseq
        %v2173 = vshrl.u32 %v2172, 7
        %v2174 = vsub.s32 %v1915, %v2173
        %v2175 = vrot.slane %v1599, %v2174
        %v2176 = vsel %vm1920, %v2175, %v2171
        %v2177 = vlaneseq
        %v2178 = vshrl.u32 %v2177, 7
        %v2179 = vsub.s32 %v1922, %v2178
        %v2180 = vrot.slane %v1601, %v2179
        %v2181 = vsel %vm1927, %v2180, %v2176
        %v2182 = vlaneseq
        %v2183 = vshrl.u32 %v2182, 7
        %v2184 = vsub.s32 %v1929, %v2183
        %v2185 = vrot.slane %v1603, %v2184
        %v2186 = vsel %vm1934, %v2185, %v2181
        %v2187 = vlaneseq
        %v2188 = vshrl.u32 %v2187, 7
        %v2189 = vsub.s32 %v1936, %v2188
        %v2190 = vrot.slane %v1605, %v2189
        %v2191 = vsel %vm1941, %v2190, %v2186
        %v2192 = vlaneseq
        %v2193 = vshrl.u32 %v2192, 7
        %v2194 = vsub.s32 %v1943, %v2193
        %v2195 = vrot.slane %v1607, %v2194
        %v2196 = vsel %vm1948, %v2195, %v2191
        %v2197 = vlaneseq
        %v2198 = vshrl.u32 %v2197, 7
        %v2199 = vsub.s32 %v1950, %v2198
        %v2200 = vrot.slane %v1609, %v2199
        %v2201 = vsel %vm1955, %v2200, %v2196
        %v2202 = vlaneseq
        %v2203 = vshrl.u32 %v2202, 7
        %v2204 = vsub.s32 %v1957, %v2203
        %v2205 = vrot.slane %v1611, %v2204
        %v2206 = vsel %vm1962, %v2205, %v2201
        %v2207 = vlaneseq
        %v2208 = vshrl.u32 %v2207, 7
        %v2209 = vsub.s32 %v1964, %v2208
        %v2210 = vrot.slane %v1613, %v2209
        %v2211 = vsel %vm1969, %v2210, %v2206
        %v2212 = vlaneseq
        %v2213 = vshrl.u32 %v2212, 7
        %v2214 = vsub.s32 %v1971, %v2213
        %v2215 = vrot.slane %v1615, %v2214
        %v2216 = vsel %vm1976, %v2215, %v2211
        %v2217 = vlaneseq
        %v2218 = vshrl.u32 %v2217, 7
        %v2219 = vsub.s32 %v1978, %v2218
        %v2220 = vrot.slane %v1617, %v2219
        %v2221 = vsel %vm1983, %v2220, %v2216
        %v2222 = vlaneseq
        %v2223 = vshrl.u32 %v2222, 7
        %v2224 = vsub.s32 %v1875, %v2223
        %v2225 = vrot.slane %v1619, %v2224
        %v2226 = vlaneseq
        %v2227 = vshrl.u32 %v2226, 7
        %v2228 = vsub.s32 %v1880, %v2227
        %v2229 = vrot.slane %v1621, %v2228
        %v2230 = vsel %vm1885, %v2229, %v2225
        %v2231 = vlaneseq
        %v2232 = vshrl.u32 %v2231, 7
        %v2233 = vsub.s32 %v1887, %v2232
        %v2234 = vrot.slane %v1623, %v2233
        %v2235 = vsel %vm1892, %v2234, %v2230
        %v2236 = vlaneseq
        %v2237 = vshrl.u32 %v2236, 7
        %v2238 = vsub.s32 %v1894, %v2237
        %v2239 = vrot.slane %v1625, %v2238
        %v2240 = vsel %vm1899, %v2239, %v2235
        %v2241 = vlaneseq
        %v2242 = vshrl.u32 %v2241, 7
        %v2243 = vsub.s32 %v1901, %v2242
        %v2244 = vrot.slane %v1627, %v2243
        %v2245 = vsel %vm1906, %v2244, %v2240
        %v2246 = vlaneseq
        %v2247 = vshrl.u32 %v2246, 7
        %v2248 = vsub.s32 %v1908, %v2247
        %v2249 = vrot.slane %v1629, %v2248
        %v2250 = vsel %vm1913, %v2249, %v2245
        %v2251 = vlaneseq
        %v2252 = vshrl.u32 %v2251, 7
        %v2253 = vsub.s32 %v1915, %v2252
        %v2254 = vrot.slane %v1631, %v2253
        %v2255 = vsel %vm1920, %v2254, %v2250
        %v2256 = vlaneseq
        %v2257 = vshrl.u32 %v2256, 7
        %v2258 = vsub.s32 %v1922, %v2257
        %v2259 = vrot.slane %v1633, %v2258
        %v2260 = vsel %vm1927, %v2259, %v2255
        %v2261 = vlaneseq
        %v2262 = vshrl.u32 %v2261, 7
        %v2263 = vsub.s32 %v1929, %v2262
        %v2264 = vrot.slane %v1635, %v2263
        %v2265 = vsel %vm1934, %v2264, %v2260
        %v2266 = vlaneseq
        %v2267 = vshrl.u32 %v2266, 7
        %v2268 = vsub.s32 %v1936, %v2267
        %v2269 = vrot.slane %v1637, %v2268
        %v2270 = vsel %vm1941, %v2269, %v2265
        %v2271 = vlaneseq
        %v2272 = vshrl.u32 %v2271, 7
        %v2273 = vsub.s32 %v1943, %v2272
        %v2274 = vrot.slane %v1639, %v2273
        %v2275 = vsel %vm1948, %v2274, %v2270
        %v2276 = vlaneseq
        %v2277 = vshrl.u32 %v2276, 7
        %v2278 = vsub.s32 %v1950, %v2277
        %v2279 = vrot.slane %v1641, %v2278
        %v2280 = vsel %vm1955, %v2279, %v2275
        %v2281 = vlaneseq
        %v2282 = vshrl.u32 %v2281, 7
        %v2283 = vsub.s32 %v1957, %v2282
        %v2284 = vrot.slane %v1643, %v2283
        %v2285 = vsel %vm1962, %v2284, %v2280
        %v2286 = vlaneseq
        %v2287 = vshrl.u32 %v2286, 7
        %v2288 = vsub.s32 %v1964, %v2287
        %v2289 = vrot.slane %v1645, %v2288
        %v2290 = vsel %vm1969, %v2289, %v2285
        %v2291 = vlaneseq
        %v2292 = vshrl.u32 %v2291, 7
        %v2293 = vsub.s32 %v1971, %v2292
        %v2294 = vrot.slane %v1647, %v2293
        %v2295 = vsel %vm1976, %v2294, %v2290
        %v2296 = vlaneseq
        %v2297 = vshrl.u32 %v2296, 7
        %v2298 = vsub.s32 %v1978, %v2297
        %v2299 = vrot.slane %v1649, %v2298
        %v2300 = vsel %vm1983, %v2299, %v2295
        %v2301 = vlaneseq
        %v2302 = vshrl.u32 %v2301, 7
        %v2303 = vsub.s32 %v1875, %v2302
        %v2304 = vrot.slane %v1651, %v2303
        %v2305 = vlaneseq
        %v2306 = vshrl.u32 %v2305, 7
        %v2307 = vsub.s32 %v1880, %v2306
        %v2308 = vrot.slane %v1653, %v2307
        %v2309 = vsel %vm1885, %v2308, %v2304
        %v2310 = vlaneseq
        %v2311 = vshrl.u32 %v2310, 7
        %v2312 = vsub.s32 %v1887, %v2311
        %v2313 = vrot.slane %v1655, %v2312
        %v2314 = vsel %vm1892, %v2313, %v2309
        %v2315 = vlaneseq
        %v2316 = vshrl.u32 %v2315, 7
        %v2317 = vsub.s32 %v1894, %v2316
        %v2318 = vrot.slane %v1657, %v2317
        %v2319 = vsel %vm1899, %v2318, %v2314
        %v2320 = vlaneseq
        %v2321 = vshrl.u32 %v2320, 7
        %v2322 = vsub.s32 %v1901, %v2321
        %v2323 = vrot.slane %v1659, %v2322
        %v2324 = vsel %vm1906, %v2323, %v2319
        %v2325 = vlaneseq
        %v2326 = vshrl.u32 %v2325, 7
        %v2327 = vsub.s32 %v1908, %v2326
        %v2328 = vrot.slane %v1661, %v2327
        %v2329 = vsel %vm1913, %v2328, %v2324
        %v2330 = vlaneseq
        %v2331 = vshrl.u32 %v2330, 7
        %v2332 = vsub.s32 %v1915, %v2331
        %v2333 = vrot.slane %v1663, %v2332
        %v2334 = vsel %vm1920, %v2333, %v2329
        %v2335 = vlaneseq
        %v2336 = vshrl.u32 %v2335, 7
        %v2337 = vsub.s32 %v1922, %v2336
        %v2338 = vrot.slane %v1665, %v2337
        %v2339 = vsel %vm1927, %v2338, %v2334
        %v2340 = vlaneseq
        %v2341 = vshrl.u32 %v2340, 7
        %v2342 = vsub.s32 %v1929, %v2341
        %v2343 = vrot.slane %v1667, %v2342
        %v2344 = vsel %vm1934, %v2343, %v2339
        %v2345 = vlaneseq
        %v2346 = vshrl.u32 %v2345, 7
        %v2347 = vsub.s32 %v1936, %v2346
        %v2348 = vrot.slane %v1669, %v2347
        %v2349 = vsel %vm1941, %v2348, %v2344
        %v2350 = vlaneseq
        %v2351 = vshrl.u32 %v2350, 7
        %v2352 = vsub.s32 %v1943, %v2351
        %v2353 = vrot.slane %v1671, %v2352
        %v2354 = vsel %vm1948, %v2353, %v2349
        %v2355 = vlaneseq
        %v2356 = vshrl.u32 %v2355, 7
        %v2357 = vsub.s32 %v1950, %v2356
        %v2358 = vrot.slane %v1673, %v2357
        %v2359 = vsel %vm1955, %v2358, %v2354
        %v2360 = vlaneseq
        %v2361 = vshrl.u32 %v2360, 7
        %v2362 = vsub.s32 %v1957, %v2361
        %v2363 = vrot.slane %v1675, %v2362
        %v2364 = vsel %vm1962, %v2363, %v2359
        %v2365 = vlaneseq
        %v2366 = vshrl.u32 %v2365, 7
        %v2367 = vsub.s32 %v1964, %v2366
        %v2368 = vrot.slane %v1677, %v2367
        %v2369 = vsel %vm1969, %v2368, %v2364
        %v2370 = vlaneseq
        %v2371 = vshrl.u32 %v2370, 7
        %v2372 = vsub.s32 %v1971, %v2371
        %v2373 = vrot.slane %v1679, %v2372
        %v2374 = vsel %vm1976, %v2373, %v2369
        %v2375 = vlaneseq
        %v2376 = vshrl.u32 %v2375, 7
        %v2377 = vsub.s32 %v1978, %v2376
        %v2378 = vrot.slane %v1681, %v2377
        %v2379 = vsel %vm1983, %v2378, %v2374
        %v2380 = vlaneseq
        %v2381 = vshrl.u32 %v2380, 7
        %v2382 = vsub.s32 %v1875, %v2381
        %v2383 = vrot.slane %v1683, %v2382
        %v2384 = vlaneseq
        %v2385 = vshrl.u32 %v2384, 7
        %v2386 = vsub.s32 %v1880, %v2385
        %v2387 = vrot.slane %v1685, %v2386
        %v2388 = vsel %vm1885, %v2387, %v2383
        %v2389 = vlaneseq
        %v2390 = vshrl.u32 %v2389, 7
        %v2391 = vsub.s32 %v1887, %v2390
        %v2392 = vrot.slane %v1687, %v2391
        %v2393 = vsel %vm1892, %v2392, %v2388
        %v2394 = vlaneseq
        %v2395 = vshrl.u32 %v2394, 7
        %v2396 = vsub.s32 %v1894, %v2395
        %v2397 = vrot.slane %v1689, %v2396
        %v2398 = vsel %vm1899, %v2397, %v2393
        %v2399 = vlaneseq
        %v2400 = vshrl.u32 %v2399, 7
        %v2401 = vsub.s32 %v1901, %v2400
        %v2402 = vrot.slane %v1691, %v2401
        %v2403 = vsel %vm1906, %v2402, %v2398
        %v2404 = vlaneseq
        %v2405 = vshrl.u32 %v2404, 7
        %v2406 = vsub.s32 %v1908, %v2405
        %v2407 = vrot.slane %v1693, %v2406
        %v2408 = vsel %vm1913, %v2407, %v2403
        %v2409 = vlaneseq
        %v2410 = vshrl.u32 %v2409, 7
        %v2411 = vsub.s32 %v1915, %v2410
        %v2412 = vrot.slane %v1695, %v2411
        %v2413 = vsel %vm1920, %v2412, %v2408
        %v2414 = vlaneseq
        %v2415 = vshrl.u32 %v2414, 7
        %v2416 = vsub.s32 %v1922, %v2415
        %v2417 = vrot.slane %v1697, %v2416
        %v2418 = vsel %vm1927, %v2417, %v2413
        %v2419 = vlaneseq
        %v2420 = vshrl.u32 %v2419, 7
        %v2421 = vsub.s32 %v1929, %v2420
        %v2422 = vrot.slane %v1699, %v2421
        %v2423 = vsel %vm1934, %v2422, %v2418
        %v2424 = vlaneseq
        %v2425 = vshrl.u32 %v2424, 7
        %v2426 = vsub.s32 %v1936, %v2425
        %v2427 = vrot.slane %v1701, %v2426
        %v2428 = vsel %vm1941, %v2427, %v2423
        %v2429 = vlaneseq
        %v2430 = vshrl.u32 %v2429, 7
        %v2431 = vsub.s32 %v1943, %v2430
        %v2432 = vrot.slane %v1703, %v2431
        %v2433 = vsel %vm1948, %v2432, %v2428
        %v2434 = vlaneseq
        %v2435 = vshrl.u32 %v2434, 7
        %v2436 = vsub.s32 %v1950, %v2435
        %v2437 = vrot.slane %v1705, %v2436
        %v2438 = vsel %vm1955, %v2437, %v2433
        %v2439 = vlaneseq
        %v2440 = vshrl.u32 %v2439, 7
        %v2441 = vsub.s32 %v1957, %v2440
        %v2442 = vrot.slane %v1707, %v2441
        %v2443 = vsel %vm1962, %v2442, %v2438
        %v2444 = vlaneseq
        %v2445 = vshrl.u32 %v2444, 7
        %v2446 = vsub.s32 %v1964, %v2445
        %v2447 = vrot.slane %v1709, %v2446
        %v2448 = vsel %vm1969, %v2447, %v2443
        %v2449 = vlaneseq
        %v2450 = vshrl.u32 %v2449, 7
        %v2451 = vsub.s32 %v1971, %v2450
        %v2452 = vrot.slane %v1711, %v2451
        %v2453 = vsel %vm1976, %v2452, %v2448
        %v2454 = vlaneseq
        %v2455 = vshrl.u32 %v2454, 7
        %v2456 = vsub.s32 %v1978, %v2455
        %v2457 = vrot.slane %v1713, %v2456
        %v2458 = vsel %vm1983, %v2457, %v2453
        %v2459 = vlaneseq
        %v2460 = vshrl.u32 %v2459, 7
        %v2461 = vsub.s32 %v1875, %v2460
        %v2462 = vrot.slane %v1715, %v2461
        %v2463 = vlaneseq
        %v2464 = vshrl.u32 %v2463, 7
        %v2465 = vsub.s32 %v1880, %v2464
        %v2466 = vrot.slane %v1717, %v2465
        %v2467 = vsel %vm1885, %v2466, %v2462
        %v2468 = vlaneseq
        %v2469 = vshrl.u32 %v2468, 7
        %v2470 = vsub.s32 %v1887, %v2469
        %v2471 = vrot.slane %v1719, %v2470
        %v2472 = vsel %vm1892, %v2471, %v2467
        %v2473 = vlaneseq
        %v2474 = vshrl.u32 %v2473, 7
        %v2475 = vsub.s32 %v1894, %v2474
        %v2476 = vrot.slane %v1721, %v2475
        %v2477 = vsel %vm1899, %v2476, %v2472
        %v2478 = vlaneseq
        %v2479 = vshrl.u32 %v2478, 7
        %v2480 = vsub.s32 %v1901, %v2479
        %v2481 = vrot.slane %v1723, %v2480
        %v2482 = vsel %vm1906, %v2481, %v2477
        %v2483 = vlaneseq
        %v2484 = vshrl.u32 %v2483, 7
        %v2485 = vsub.s32 %v1908, %v2484
        %v2486 = vrot.slane %v1725, %v2485
        %v2487 = vsel %vm1913, %v2486, %v2482
        %v2488 = vlaneseq
        %v2489 = vshrl.u32 %v2488, 7
        %v2490 = vsub.s32 %v1915, %v2489
        %v2491 = vrot.slane %v1727, %v2490
        %v2492 = vsel %vm1920, %v2491, %v2487
        %v2493 = vlaneseq
        %v2494 = vshrl.u32 %v2493, 7
        %v2495 = vsub.s32 %v1922, %v2494
        %v2496 = vrot.slane %v1729, %v2495
        %v2497 = vsel %vm1927, %v2496, %v2492
        %v2498 = vlaneseq
        %v2499 = vshrl.u32 %v2498, 7
        %v2500 = vsub.s32 %v1929, %v2499
        %v2501 = vrot.slane %v1731, %v2500
        %v2502 = vsel %vm1934, %v2501, %v2497
        %v2503 = vlaneseq
        %v2504 = vshrl.u32 %v2503, 7
        %v2505 = vsub.s32 %v1936, %v2504
        %v2506 = vrot.slane %v1733, %v2505
        %v2507 = vsel %vm1941, %v2506, %v2502
        %v2508 = vlaneseq
        %v2509 = vshrl.u32 %v2508, 7
        %v2510 = vsub.s32 %v1943, %v2509
        %v2511 = vrot.slane %v1735, %v2510
        %v2512 = vsel %vm1948, %v2511, %v2507
        %v2513 = vlaneseq
        %v2514 = vshrl.u32 %v2513, 7
        %v2515 = vsub.s32 %v1950, %v2514
        %v2516 = vrot.slane %v1737, %v2515
        %v2517 = vsel %vm1955, %v2516, %v2512
        %v2518 = vlaneseq
        %v2519 = vshrl.u32 %v2518, 7
        %v2520 = vsub.s32 %v1957, %v2519
        %v2521 = vrot.slane %v1739, %v2520
        %v2522 = vsel %vm1962, %v2521, %v2517
        %v2523 = vlaneseq
        %v2524 = vshrl.u32 %v2523, 7
        %v2525 = vsub.s32 %v1964, %v2524
        %v2526 = vrot.slane %v1741, %v2525
        %v2527 = vsel %vm1969, %v2526, %v2522
        %v2528 = vlaneseq
        %v2529 = vshrl.u32 %v2528, 7
        %v2530 = vsub.s32 %v1971, %v2529
        %v2531 = vrot.slane %v1743, %v2530
        %v2532 = vsel %vm1976, %v2531, %v2527
        %v2533 = vlaneseq
        %v2534 = vshrl.u32 %v2533, 7
        %v2535 = vsub.s32 %v1978, %v2534
        %v2536 = vrot.slane %v1745, %v2535
        %v2537 = vsel %vm1983, %v2536, %v2532
        %vm2538 = vcmask 1041409
        %v2539 = vsel %vm2538, %v2063, %v1984
        %vm2540 = vcmask 1042434
        %v2541 = vsel %vm2540, %v2142, %v2539
        %vm2542 = vcmask 1043459
        %v2543 = vsel %vm2542, %v2221, %v2541
        %vm2544 = vcmask 1044484
        %v2545 = vsel %vm2544, %v2300, %v2543
        %vm2546 = vcmask 1045509
        %v2547 = vsel %vm2546, %v2379, %v2545
        %vm2548 = vcmask 1046534
        %v2549 = vsel %vm2548, %v2458, %v2547
        %vm2550 = vcmask 1047559
        %v2551 = vsel %vm2550, %v2537, %v2549
        %2553 = vst [vmem:[%s182] sm:$0xff] %v2551
        %s2554 = sand.u32 %s94, 1
        %s2555 = scalar_lea.sflag [#allocation4], %s2554
        %s2556 = sand.u32 %s94, 1
        %s2557 = smul.addr %s2556, 8
        %s2558 = scalar_lea.vmem [#allocation3], %s2557
        // Predicated region
        $region33: #{tpu_custom_call.1} parent=31 // pred_check
          %p2559 = pneg %p104
        $region34: #{tpu_custom_call.1} parent=31 // pred_check_branch
          %2561 = sbr.rel (%p2559) target = $region36
        $region35: #{tpu_custom_call.1} parent=31 // pred_region
          %s2563 = ssub.s32 128, 128
          %2564 = vsyncadd %s2555, %s2563
          %s2565 = smul.addr %s18, 128
          %s2566 = scalar_lea.hbm %s3, %s2565
          %s2568 = sshll.u32 %s2558, 4
          %s2569 = int_to_ptr.vmem [resolvable:$true] %s2568
          %2571 = dma.vmem_to_hbm [thread:$0]  %s2569, 128, %s2566, %s2555
        $region36: #{tpu_custom_call.1} parent=31 // pred_fallthru
          _
      $region32: #{tpu_custom_call.1} parent=5 // pred_fallthru
        _
      %p2572 = scmp.le.s32.totalorder 2, %s13
      // Predicated region
      $region37: #{tpu_custom_call.1} parent=5 // pred_check
        %p2573 = pneg %p2572
      $region38: #{tpu_custom_call.1} parent=5 // pred_check_branch
        %2575 = sbr.rel (%p2573) target = $region40
      $region39: #{tpu_custom_call.1} parent=5 // pred_region
        %s2576 = ssub.s32 %s13, 2
        // Predicated region
        $region41: #{tpu_custom_call.1} parent=39 // pred_check
          %p2577 = pneg %p110
        $region42: #{tpu_custom_call.1} parent=39 // pred_check_branch
          %2579 = sbr.rel (%p2577) target = $region44
        $region43: #{tpu_custom_call.1} parent=39 // pred_region
          %s2580 = sand.u32 %s95, 1
          %s2581 = scalar_lea.sflag [#allocation4], %s2580
          %s2582 = sand.u32 %s95, 1
          %s2583 = smul.addr %s2582, 8
          %s2584 = scalar_lea.vmem [#allocation3], %s2583
          %2585 = dma.done %s2581, 128
        $region44: #{tpu_custom_call.1} parent=39 // pred_fallthru
          _
      $region40: #{tpu_custom_call.1} parent=5 // pred_fallthru
        _
    $region6: #{tpu_custom_call.1} parent=1 // loop_footer
      %s17 = sadd.s32 1, %s13
    $region7: #{tpu_custom_call.1} parent=1 // loop_footer_branch
      %12 = sbr.rel target = $region3
    $region8: #{tpu_custom_call.1} parent=1 // loop_exit
      _
    %2586 = vsyncpa [#allocation4], 1
    %s2587 = scalar_lea.sflag [#allocation4], 1
    %2588 = vsyncpa %s2587, 1

</llo_original>
